<compile_context>
chip_gen: v7x
topology: tpu7x:2x2x1
jax: 0.10.0
libtpu: 0.0.40
codegen_flags: <defaults>
</compile_context>

<pallas_src>
import functools

import jax
import jax.numpy as jnp
from jax import lax
from jax.experimental import pallas as pl
from jax.experimental.pallas import tpu as pltpu


_H_PAD = 128      # hidden state padded to one full vreg lane group
_FUSED = 256      # fused first-layer width: [ i2h | pad | i2o1 | pad ]
_O1 = 64          # i2o1 output width (hardcoded 64 in the PyTorch module)
_OUT_PAD = 128    # padded logits / log-softmax lane width
_NEG_BIG = -1e30  # "minus infinity" for padded logit lanes (exp underflows to 0)


def _rnn_kernel(x_ref, h0_ref, w1x_ref, w1h_ref, w2_ref, b1_ref, b2_ref,
                out_ref, h_final_ref, *, seq_len):
    """Full T-step recurrence for one batch chunk.

    Shapes (per chunk):
      x_ref       (T, B, input_size)
      h0_ref      (B, 128)    real hidden in lanes [:hidden_size], rest zero
      w1x_ref     (input_size, 256)
      w1h_ref     (128, 256)  padded hidden rows are zero
      w2_ref      (128, 128)  rows >= 64 and cols >= output_size are zero
      b1_ref      (1, 256)    padded lanes zero
      b2_ref      (1, 128)    lanes >= output_size are -1e30
      out_ref     (T, B, 128)
      h_final_ref (B, 128)
    """

    def step(t, h):
        # Weight reads stay inside the loop: cheap VMEM loads with short live
        # ranges (avoids vreg spills across the unrolled steps).
        w1x = w1x_ref[...]
        w1h = w1h_ref[...]
        x_t = x_ref[t]

        # cat(x, h) @ [W_i2h | W_i2o1]  ==  x @ W_x + h @ W_h   (fused N=256)
        comb = (jnp.dot(x_t.astype(w1x.dtype), w1x,
                        preferred_element_type=jnp.float32)
                + jnp.dot(h.astype(w1h.dtype), w1h,
                          preferred_element_type=jnp.float32)
                + b1_ref[...])                        # (B, 256), f32

        h_new = comb[:, :_H_PAD]   # lane-aligned slice; padded lanes stay 0
        o1 = comb[:, _H_PAD:]      # lane-aligned slice; lanes >= 64 are 0

        w2 = w2_ref[...]
        logits = (jnp.dot(o1.astype(w2.dtype), w2,
                          preferred_element_type=jnp.float32)
                  + b2_ref[...])                      # (B, 128), padded = -1e30

        # LogSoftmax(dim=1), numerically stable. Padded lanes contribute
        # exp(-1e30 - m) == 0, so the real-class results are exact.
        m = jnp.max(logits, axis=1, keepdims=True)
        lse = m + jnp.log(jnp.sum(jnp.exp(logits - m), axis=1, keepdims=True))
        out_ref[t] = (logits - lse).astype(out_ref.dtype)   # lane-dense store
        return h_new

    h0 = h0_ref[...].astype(jnp.float32)
    h_final = lax.fori_loop(0, seq_len, step, h0, unroll=True)
    h_final_ref[...] = h_final.astype(h_final_ref.dtype)


def pack_params(params, input_size, hidden_size, output_size,
                weight_dtype=jnp.float32):
    """Pad + fuse the (transposed) Linear parameters for the kernel.

    Padded rows/columns are zero except bias2's padded lanes (-1e30), so the
    padded hidden lanes stay zero through the recurrence and the in-kernel
    log-softmax ignores the padded logit lanes.
    """
    w_i2h, b_i2h, w_o1, b_o1, w_o2, b_o2 = params
    d = input_size + hidden_size
    assert hidden_size <= _H_PAD and _O1 <= _H_PAD and output_size <= _OUT_PAD

    # Fused first layer: columns [0:128) = i2h (hidden_size used),
    #                    columns [128:256) = i2o1 (64 used).
    w1 = jnp.zeros((d, _FUSED), jnp.float32)
    w1 = w1.at[:, :hidden_size].set(w_i2h)
    w1 = w1.at[:, _H_PAD:_H_PAD + _O1].set(w_o1)
    w1_x = w1[:input_size]                                      # (in, 256)
    w1_h = jnp.zeros((_H_PAD, _FUSED), jnp.float32)
    w1_h = w1_h.at[:hidden_size].set(w1[input_size:])            # (128, 256)

    b1 = jnp.zeros((1, _FUSED), jnp.float32)
    b1 = b1.at[:, :hidden_size].set(b_i2h)
    b1 = b1.at[:, _H_PAD:_H_PAD + _O1].set(b_o1)

    w2 = jnp.zeros((_H_PAD, _OUT_PAD), jnp.float32)
    w2 = w2.at[:_O1, :output_size].set(w_o2)                     # (128, 128)
    b2 = jnp.full((1, _OUT_PAD), _NEG_BIG, jnp.float32)
    b2 = b2.at[:, :output_size].set(b_o2)

    # bf16 weights + f32 accumulate is the MXU fast path on v6e/v7x; biases
    # and all post-matmul elementwise work stay f32.
    return (w1_x.astype(weight_dtype), w1_h.astype(weight_dtype),
            w2.astype(weight_dtype), b1, b2)


def rnn_sequence(x_seq, h0, packed, hidden_size, output_size, *, block_b=None):
    """Run T RNN steps in one pallas_call.

    x_seq: (T, B, input_size), h0: (B, hidden_size).
    Returns (log_softmax outputs (T, B, output_size), final hidden (B, H)).
    Set block_b < B to shard batch chunks across cores (v7x megacore).
    """
    w1x, w1h, w2, b1, b2 = packed
    T, B, input_size = x_seq.shape

    if block_b is None:
        block_b = B
    assert B % block_b == 0 and (block_b == B or block_b % 8 == 0)
    nb = B // block_b

    # Pad the initial hidden state to 128 lanes; padded lanes stay zero
    # throughout the recurrence because the padded weight/bias lanes are zero.
    h0p = jnp.zeros((B, _H_PAD), jnp.float32)
    h0p = h0p.at[:, :hidden_size].set(h0.astype(jnp.float32))

    kernel = functools.partial(_rnn_kernel, seq_len=T)
    const = lambda i: (0, 0)   # weights / biases: resident, single DMA

    grid_spec = pltpu.PrefetchScalarGridSpec(
        num_scalar_prefetch=0,
        grid=(nb,),                                                # batch chunks
        in_specs=[
            pl.BlockSpec((T, block_b, input_size), lambda i: (0, i, 0)),  # x
            pl.BlockSpec((block_b, _H_PAD), lambda i: (i, 0)),            # h0
            pl.BlockSpec((input_size, _FUSED), const),                    # W1_x
            pl.BlockSpec((_H_PAD, _FUSED), const),                        # W1_h
            pl.BlockSpec((_H_PAD, _OUT_PAD), const),                      # W2
            pl.BlockSpec((1, _FUSED), const),                             # b1
            pl.BlockSpec((1, _OUT_PAD), const),                           # b2
        ],
        out_specs=(
            pl.BlockSpec((T, block_b, _OUT_PAD), lambda i: (0, i, 0)),    # out
            pl.BlockSpec((block_b, _H_PAD), lambda i: (i, 0)),            # h_T
        ),
    )

    flops = T * B * 2 * (input_size * _FUSED + _H_PAD * _FUSED
                         + _H_PAD * _OUT_PAD)
    bytes_accessed = (4 * (x_seq.size + h0p.size + b1.size + b2.size
                           + T * B * _OUT_PAD + B * _H_PAD)
                      + w1x.size * w1x.dtype.itemsize
                      + w1h.size * w1h.dtype.itemsize
                      + w2.size * w2.dtype.itemsize)
    cost = pl.CostEstimate(flops=int(flops),
                           transcendentals=int(T * B * (_OUT_PAD + 1)),
                           bytes_accessed=int(bytes_accessed))

    out_pad, h_final_pad = pl.pallas_call(
        kernel,
        grid_spec=grid_spec,
        out_shape=(
            jax.ShapeDtypeStruct((T, B, _OUT_PAD), jnp.float32),
            jax.ShapeDtypeStruct((B, _H_PAD), jnp.float32),
        ),
        compiler_params=pltpu.CompilerParams(
            dimension_semantics=("parallel",)),        # batch chunks -> megacore
        cost_estimate=cost,
    )(x_seq, h0p, w1x, w1h, w2, b1, b2)

    return out_pad[:, :, :output_size], h_final_pad[:, :hidden_size]


def rnn_forward(input_tensor, hidden_tensor, packed, hidden_size, output_size):
    """Exact equivalent of the PyTorch module's single-step forward()."""
    out_seq, hidden = rnn_sequence(input_tensor[None], hidden_tensor, packed,
                                   hidden_size, output_size)
    return out_seq[0], hidden


def init_params(key, input_size, hidden_size, output_size):
    """Deterministic synthetic parameters (PyTorch nn.Linear init, stored
    transposed as (in, out); biases kept as (1, out) for TPU-friendly 2D)."""
    ks = jax.random.split(key, 6)
    d = input_size + hidden_size

    def uniform(k, shape, fan_in):
        bound = 1.0 / jnp.sqrt(float(fan_in))
        return jax.random.uniform(k, shape, jnp.float32, -bound, bound)

    w_i2h = uniform(ks[0], (d, hidden_size), d)
    b_i2h = uniform(ks[1], (1, hidden_size), d)
    w_o1 = uniform(ks[2], (d, _O1), d)
    b_o1 = uniform(ks[3], (1, _O1), d)
    w_o2 = uniform(ks[4], (_O1, output_size), _O1)
    b_o2 = uniform(ks[5], (1, output_size), _O1)
    return (w_i2h, b_i2h, w_o1, b_o1, w_o2, b_o2)


if __name__ == "__main__":
    input_size = 40     # stand-in for X_train.shape[3]
    hidden_size = 96    # from the script
    output_size = 10
    batch = 8           # fills all 8 vreg sublanes (scale up to fill the MXU)
    seq_len = 5         # X_train.reshape(train_num, 5, 1, -1) -> 5 time steps

    key = jax.random.PRNGKey(0)
    k_x, k_par = jax.random.split(key, 2)

    x_seq = jax.random.normal(k_x, (seq_len, batch, input_size), jnp.float32)
    h0 = jnp.zeros((batch, hidden_size), jnp.float32)   # init_hidden (batched)
    params = init_params(k_par, input_size, hidden_size, output_size)
    packed = pack_params(params, input_size, hidden_size, output_size)

    out_seq, h_final = rnn_sequence(x_seq, h0, packed, hidden_size, output_size)
    jax.block_until_ready((out_seq, h_final))

    # Pure-JAX reference: the original module's forward applied step by step.
    w_i2h, b_i2h, w_o1, b_o1, w_o2, b_o2 = params
    h = h0
    ref_outs = []
    for t in range(seq_len):
        comb = jnp.concatenate([x_seq[t], h], axis=1)
        h_new = comb @ w_i2h + b_i2h
        o = (comb @ w_o1 + b_o1) @ w_o2 + b_o2
        ref_outs.append(jax.nn.log_softmax(o, axis=1))
        h = h_new
    ref_out_seq = jnp.stack(ref_outs, axis=0)

    assert out_seq.shape == (seq_len, batch, output_size)
    assert h_final.shape == (batch, hidden_size)
    assert jnp.allclose(out_seq, ref_out_seq, atol=1e-4), "output mismatch"
    assert jnp.allclose(h_final, h, atol=1e-4), "hidden mismatch"

    # Also exercise the single-step path (exactly the module's forward()).
    out1, h1 = rnn_forward(x_seq[0], h0, packed, hidden_size, output_size)
    jax.block_until_ready((out1, h1))
    ref_h1 = jnp.concatenate([x_seq[0], h0], axis=1) @ w_i2h + b_i2h
    assert jnp.allclose(out1, ref_out_seq[0], atol=1e-4), "step output mismatch"
    assert jnp.allclose(h1, ref_h1, atol=1e-4), "step hidden mismatch"

    print("KERNEL_OK")
</pallas_src>

<mosaic_0001>
module attributes {stable_mosaic.version = 11 : i64} {
  func.func @_rnn_kernel(%arg0: i32, %arg1: memref<5x8x40xf32, #tpu.memory_space<vmem>>, %arg2: memref<8x128xf32, #tpu.memory_space<vmem>>, %arg3: memref<40x256xf32, #tpu.memory_space<vmem>>, %arg4: memref<128x256xf32, #tpu.memory_space<vmem>>, %arg5: memref<128x128xf32, #tpu.memory_space<vmem>>, %arg6: memref<1x256xf32, #tpu.memory_space<vmem>>, %arg7: memref<1x128xf32, #tpu.memory_space<vmem>>, %arg8: memref<5x8x128xf32, #tpu.memory_space<vmem>>, %arg9: memref<8x128xf32, #tpu.memory_space<vmem>>) attributes {dimension_semantics = [#tpu.dimension_semantics<parallel>], iteration_bounds = array<i64: 1>, scalar_prefetch = 0 : i64, scratch_operands = 0 : i64, tpu.core_type = #tpu.core_type<tc>, window_params = [{transform_indices = @transform_0, window_bounds = array<i64: 5, 8, 40>}, {transform_indices = @transform_1, window_bounds = array<i64: 8, 128>}, {pipeline_mode = #tpu.pipeline_mode<synchronous>, transform_indices = @transform_2, window_bounds = array<i64: 40, 256>}, {pipeline_mode = #tpu.pipeline_mode<synchronous>, transform_indices = @transform_3, window_bounds = array<i64: 128, 256>}, {pipeline_mode = #tpu.pipeline_mode<synchronous>, transform_indices = @transform_4, window_bounds = array<i64: 128, 128>}, {pipeline_mode = #tpu.pipeline_mode<synchronous>, transform_indices = @transform_5, window_bounds = array<i64: 1, 256>}, {pipeline_mode = #tpu.pipeline_mode<synchronous>, transform_indices = @transform_6, window_bounds = array<i64: 1, 128>}, {transform_indices = @transform_7, window_bounds = array<i64: 5, 8, 128>}, {transform_indices = @transform_8, window_bounds = array<i64: 8, 128>}]} {
    %c0 = arith.constant 0 : index
    %c0_0 = arith.constant 0 : index
    %0 = vector.load %arg2[%c0, %c0_0] : memref<8x128xf32, #tpu.memory_space<vmem>>, vector<8x128xf32>
    %c0_i32 = arith.constant 0 : i32
    %c0_1 = arith.constant 0 : index
    %c0_2 = arith.constant 0 : index
    %1 = vector.load %arg3[%c0_1, %c0_2] : memref<40x256xf32, #tpu.memory_space<vmem>>, vector<40x256xf32>
    %c0_3 = arith.constant 0 : index
    %c0_4 = arith.constant 0 : index
    %2 = vector.load %arg4[%c0_3, %c0_4] : memref<128x256xf32, #tpu.memory_space<vmem>>, vector<128x256xf32>
    %3 = arith.index_cast %c0_i32 : i32 to index
    %c0_5 = arith.constant 0 : index
    %c0_6 = arith.constant 0 : index
    %4 = vector.load %arg1[%3, %c0_5, %c0_6] : memref<5x8x40xf32, #tpu.memory_space<vmem>>, vector<1x8x40xf32>
    %5 = vector.shape_cast %4 : vector<1x8x40xf32> to vector<8x40xf32>
    %cst = arith.constant dense<0.000000e+00> : vector<8x256xf32>
    %6 = tpu.matmul %5, %1, %cst {dimension_numbers = #tpu.dot_dimension_numbers<[1], [0], [0], [1], [0, 0, 1, 1], [], []>} : vector<8x40xf32>, vector<40x256xf32>, vector<8x256xf32> -> vector<8x256xf32>
    %cst_7 = arith.constant dense<0.000000e+00> : vector<8x256xf32>
    %7 = tpu.matmul %0, %2, %cst_7 {dimension_numbers = #tpu.dot_dimension_numbers<[1], [0], [0], [1], [0, 0, 1, 1], [], []>} : vector<8x128xf32>, vector<128x256xf32>, vector<8x256xf32> -> vector<8x256xf32>
    %8 = arith.addf %6, %7 : vector<8x256xf32>
    %c0_8 = arith.constant 0 : index
    %c0_9 = arith.constant 0 : index
    %9 = vector.load %arg6[%c0_8, %c0_9] : memref<1x256xf32, #tpu.memory_space<vmem>>, vector<1x256xf32>
    %10 = vector.broadcast %9 : vector<1x256xf32> to vector<8x256xf32>
    %11 = arith.addf %8, %10 : vector<8x256xf32>
    %12 = vector.extract_strided_slice %11 {offsets = [0, 0], sizes = [8, 128], strides = [1, 1]} : vector<8x256xf32> to vector<8x128xf32>
    %13 = vector.extract_strided_slice %11 {offsets = [0, 128], sizes = [8, 128], strides = [1, 1]} : vector<8x256xf32> to vector<8x128xf32>
    %c0_10 = arith.constant 0 : index
    %c0_11 = arith.constant 0 : index
    %14 = vector.load %arg5[%c0_10, %c0_11] : memref<128x128xf32, #tpu.memory_space<vmem>>, vector<128x128xf32>
    %cst_12 = arith.constant dense<0.000000e+00> : vector<8x128xf32>
    %15 = tpu.matmul %13, %14, %cst_12 {dimension_numbers = #tpu.dot_dimension_numbers<[1], [0], [0], [1], [0, 0, 1, 1], [], []>} : vector<8x128xf32>, vector<128x128xf32>, vector<8x128xf32> -> vector<8x128xf32>
    %c0_13 = arith.constant 0 : index
    %c0_14 = arith.constant 0 : index
    %16 = vector.load %arg7[%c0_13, %c0_14] : memref<1x128xf32, #tpu.memory_space<vmem>>, vector<1x128xf32>
    %17 = vector.broadcast %16 : vector<1x128xf32> to vector<8x128xf32>
    %18 = arith.addf %15, %17 : vector<8x128xf32>
    %cst_15 = arith.constant dense<0xFF800000> : vector<8xf32>
    %19 = vector.multi_reduction <maximumf>, %18, %cst_15 [1] : vector<8x128xf32> to vector<8xf32>
    %20 = vector.shape_cast %19 : vector<8xf32> to vector<8x1xf32>
    %21 = vector.broadcast %20 : vector<8x1xf32> to vector<8x128xf32>
    %22 = arith.subf %18, %21 : vector<8x128xf32>
    %23 = math.exp %22 : vector<8x128xf32>
    %cst_16 = arith.constant dense<0.000000e+00> : vector<8xf32>
    %24 = vector.multi_reduction <add>, %23, %cst_16 [1] : vector<8x128xf32> to vector<8xf32>
    %25 = vector.shape_cast %24 : vector<8xf32> to vector<8x1xf32>
    %26 = math.log %25 : vector<8x1xf32>
    %27 = arith.addf %20, %26 : vector<8x1xf32>
    %28 = vector.broadcast %27 : vector<8x1xf32> to vector<8x128xf32>
    %29 = arith.subf %18, %28 : vector<8x128xf32>
    %30 = arith.index_cast %c0_i32 : i32 to index
    %c0_17 = arith.constant 0 : index
    %c0_18 = arith.constant 0 : index
    %31 = vector.load %arg8[%30, %c0_17, %c0_18] : memref<5x8x128xf32, #tpu.memory_space<vmem>>, vector<1x8x128xf32>
    %32 = vector.shape_cast %31 : vector<1x8x128xf32> to vector<8x128xf32>
    %33 = vector.shape_cast %29 : vector<8x128xf32> to vector<1x8x128xf32>
    tpu.vector_store %arg8[%30, %c0_17, %c0_18], %33 {strides = array<i32>} : memref<5x8x128xf32, #tpu.memory_space<vmem>>, vector<1x8x128xf32>,
    %c1_i32 = arith.constant 1 : i32
    %c0_19 = arith.constant 0 : index
    %c0_20 = arith.constant 0 : index
    %34 = vector.load %arg3[%c0_19, %c0_20] : memref<40x256xf32, #tpu.memory_space<vmem>>, vector<40x256xf32>
    %c0_21 = arith.constant 0 : index
    %c0_22 = arith.constant 0 : index
    %35 = vector.load %arg4[%c0_21, %c0_22] : memref<128x256xf32, #tpu.memory_space<vmem>>, vector<128x256xf32>
    %36 = arith.index_cast %c1_i32 : i32 to index
    %c0_23 = arith.constant 0 : index
    %c0_24 = arith.constant 0 : index
    %37 = vector.load %arg1[%36, %c0_23, %c0_24] : memref<5x8x40xf32, #tpu.memory_space<vmem>>, vector<1x8x40xf32>
    %38 = vector.shape_cast %37 : vector<1x8x40xf32> to vector<8x40xf32>
    %cst_25 = arith.constant dense<0.000000e+00> : vector<8x256xf32>
    %39 = tpu.matmul %38, %34, %cst_25 {dimension_numbers = #tpu.dot_dimension_numbers<[1], [0], [0], [1], [0, 0, 1, 1], [], []>} : vector<8x40xf32>, vector<40x256xf32>, vector<8x256xf32> -> vector<8x256xf32>
    %cst_26 = arith.constant dense<0.000000e+00> : vector<8x256xf32>
    %40 = tpu.matmul %12, %35, %cst_26 {dimension_numbers = #tpu.dot_dimension_numbers<[1], [0], [0], [1], [0, 0, 1, 1], [], []>} : vector<8x128xf32>, vector<128x256xf32>, vector<8x256xf32> -> vector<8x256xf32>
    %41 = arith.addf %39, %40 : vector<8x256xf32>
    %c0_27 = arith.constant 0 : index
    %c0_28 = arith.constant 0 : index
    %42 = vector.load %arg6[%c0_27, %c0_28] : memref<1x256xf32, #tpu.memory_space<vmem>>, vector<1x256xf32>
    %43 = vector.broadcast %42 : vector<1x256xf32> to vector<8x256xf32>
    %44 = arith.addf %41, %43 : vector<8x256xf32>
    %45 = vector.extract_strided_slice %44 {offsets = [0, 0], sizes = [8, 128], strides = [1, 1]} : vector<8x256xf32> to vector<8x128xf32>
    %46 = vector.extract_strided_slice %44 {offsets = [0, 128], sizes = [8, 128], strides = [1, 1]} : vector<8x256xf32> to vector<8x128xf32>
    %c0_29 = arith.constant 0 : index
    %c0_30 = arith.constant 0 : index
    %47 = vector.load %arg5[%c0_29, %c0_30] : memref<128x128xf32, #tpu.memory_space<vmem>>, vector<128x128xf32>
    %cst_31 = arith.constant dense<0.000000e+00> : vector<8x128xf32>
    %48 = tpu.matmul %46, %47, %cst_31 {dimension_numbers = #tpu.dot_dimension_numbers<[1], [0], [0], [1], [0, 0, 1, 1], [], []>} : vector<8x128xf32>, vector<128x128xf32>, vector<8x128xf32> -> vector<8x128xf32>
    %c0_32 = arith.constant 0 : index
    %c0_33 = arith.constant 0 : index
    %49 = vector.load %arg7[%c0_32, %c0_33] : memref<1x128xf32, #tpu.memory_space<vmem>>, vector<1x128xf32>
    %50 = vector.broadcast %49 : vector<1x128xf32> to vector<8x128xf32>
    %51 = arith.addf %48, %50 : vector<8x128xf32>
    %cst_34 = arith.constant dense<0xFF800000> : vector<8xf32>
    %52 = vector.multi_reduction <maximumf>, %51, %cst_34 [1] : vector<8x128xf32> to vector<8xf32>
    %53 = vector.shape_cast %52 : vector<8xf32> to vector<8x1xf32>
    %54 = vector.broadcast %53 : vector<8x1xf32> to vector<8x128xf32>
    %55 = arith.subf %51, %54 : vector<8x128xf32>
    %56 = math.exp %55 : vector<8x128xf32>
    %cst_35 = arith.constant dense<0.000000e+00> : vector<8xf32>
    %57 = vector.multi_reduction <add>, %56, %cst_35 [1] : vector<8x128xf32> to vector<8xf32>
    %58 = vector.shape_cast %57 : vector<8xf32> to vector<8x1xf32>
    %59 = math.log %58 : vector<8x1xf32>
    %60 = arith.addf %53, %59 : vector<8x1xf32>
    %61 = vector.broadcast %60 : vector<8x1xf32> to vector<8x128xf32>
    %62 = arith.subf %51, %61 : vector<8x128xf32>
    %63 = arith.index_cast %c1_i32 : i32 to index
    %c0_36 = arith.constant 0 : index
    %c0_37 = arith.constant 0 : index
    %64 = vector.load %arg8[%63, %c0_36, %c0_37] : memref<5x8x128xf32, #tpu.memory_space<vmem>>, vector<1x8x128xf32>
    %65 = vector.shape_cast %64 : vector<1x8x128xf32> to vector<8x128xf32>
    %66 = vector.shape_cast %62 : vector<8x128xf32> to vector<1x8x128xf32>
    tpu.vector_store %arg8[%63, %c0_36, %c0_37], %66 {strides = array<i32>} : memref<5x8x128xf32, #tpu.memory_space<vmem>>, vector<1x8x128xf32>,
    %c2_i32 = arith.constant 2 : i32
    %c0_38 = arith.constant 0 : index
    %c0_39 = arith.constant 0 : index
    %67 = vector.load %arg3[%c0_38, %c0_39] : memref<40x256xf32, #tpu.memory_space<vmem>>, vector<40x256xf32>
    %c0_40 = arith.constant 0 : index
    %c0_41 = arith.constant 0 : index
    %68 = vector.load %arg4[%c0_40, %c0_41] : memref<128x256xf32, #tpu.memory_space<vmem>>, vector<128x256xf32>
    %69 = arith.index_cast %c2_i32 : i32 to index
    %c0_42 = arith.constant 0 : index
    %c0_43 = arith.constant 0 : index
    %70 = vector.load %arg1[%69, %c0_42, %c0_43] : memref<5x8x40xf32, #tpu.memory_space<vmem>>, vector<1x8x40xf32>
    %71 = vector.shape_cast %70 : vector<1x8x40xf32> to vector<8x40xf32>
    %cst_44 = arith.constant dense<0.000000e+00> : vector<8x256xf32>
    %72 = tpu.matmul %71, %67, %cst_44 {dimension_numbers = #tpu.dot_dimension_numbers<[1], [0], [0], [1], [0, 0, 1, 1], [], []>} : vector<8x40xf32>, vector<40x256xf32>, vector<8x256xf32> -> vector<8x256xf32>
    %cst_45 = arith.constant dense<0.000000e+00> : vector<8x256xf32>
    %73 = tpu.matmul %45, %68, %cst_45 {dimension_numbers = #tpu.dot_dimension_numbers<[1], [0], [0], [1], [0, 0, 1, 1], [], []>} : vector<8x128xf32>, vector<128x256xf32>, vector<8x256xf32> -> vector<8x256xf32>
    %74 = arith.addf %72, %73 : vector<8x256xf32>
    %c0_46 = arith.constant 0 : index
    %c0_47 = arith.constant 0 : index
    %75 = vector.load %arg6[%c0_46, %c0_47] : memref<1x256xf32, #tpu.memory_space<vmem>>, vector<1x256xf32>
    %76 = vector.broadcast %75 : vector<1x256xf32> to vector<8x256xf32>
    %77 = arith.addf %74, %76 : vector<8x256xf32>
    %78 = vector.extract_strided_slice %77 {offsets = [0, 0], sizes = [8, 128], strides = [1, 1]} : vector<8x256xf32> to vector<8x128xf32>
    %79 = vector.extract_strided_slice %77 {offsets = [0, 128], sizes = [8, 128], strides = [1, 1]} : vector<8x256xf32> to vector<8x128xf32>
    %c0_48 = arith.constant 0 : index
    %c0_49 = arith.constant 0 : index
    %80 = vector.load %arg5[%c0_48, %c0_49] : memref<128x128xf32, #tpu.memory_space<vmem>>, vector<128x128xf32>
    %cst_50 = arith.constant dense<0.000000e+00> : vector<8x128xf32>
    %81 = tpu.matmul %79, %80, %cst_50 {dimension_numbers = #tpu.dot_dimension_numbers<[1], [0], [0], [1], [0, 0, 1, 1], [], []>} : vector<8x128xf32>, vector<128x128xf32>, vector<8x128xf32> -> vector<8x128xf32>
    %c0_51 = arith.constant 0 : index
    %c0_52 = arith.constant 0 : index
    %82 = vector.load %arg7[%c0_51, %c0_52] : memref<1x128xf32, #tpu.memory_space<vmem>>, vector<1x128xf32>
    %83 = vector.broadcast %82 : vector<1x128xf32> to vector<8x128xf32>
    %84 = arith.addf %81, %83 : vector<8x128xf32>
    %cst_53 = arith.constant dense<0xFF800000> : vector<8xf32>
    %85 = vector.multi_reduction <maximumf>, %84, %cst_53 [1] : vector<8x128xf32> to vector<8xf32>
    %86 = vector.shape_cast %85 : vector<8xf32> to vector<8x1xf32>
    %87 = vector.broadcast %86 : vector<8x1xf32> to vector<8x128xf32>
    %88 = arith.subf %84, %87 : vector<8x128xf32>
    %89 = math.exp %88 : vector<8x128xf32>
    %cst_54 = arith.constant dense<0.000000e+00> : vector<8xf32>
    %90 = vector.multi_reduction <add>, %89, %cst_54 [1] : vector<8x128xf32> to vector<8xf32>
    %91 = vector.shape_cast %90 : vector<8xf32> to vector<8x1xf32>
    %92 = math.log %91 : vector<8x1xf32>
    %93 = arith.addf %86, %92 : vector<8x1xf32>
    %94 = vector.broadcast %93 : vector<8x1xf32> to vector<8x128xf32>
    %95 = arith.subf %84, %94 : vector<8x128xf32>
    %96 = arith.index_cast %c2_i32 : i32 to index
    %c0_55 = arith.constant 0 : index
    %c0_56 = arith.constant 0 : index
    %97 = vector.load %arg8[%96, %c0_55, %c0_56] : memref<5x8x128xf32, #tpu.memory_space<vmem>>, vector<1x8x128xf32>
    %98 = vector.shape_cast %97 : vector<1x8x128xf32> to vector<8x128xf32>
    %99 = vector.shape_cast %95 : vector<8x128xf32> to vector<1x8x128xf32>
    tpu.vector_store %arg8[%96, %c0_55, %c0_56], %99 {strides = array<i32>} : memref<5x8x128xf32, #tpu.memory_space<vmem>>, vector<1x8x128xf32>,
    %c3_i32 = arith.constant 3 : i32
    %c0_57 = arith.constant 0 : index
    %c0_58 = arith.constant 0 : index
    %100 = vector.load %arg3[%c0_57, %c0_58] : memref<40x256xf32, #tpu.memory_space<vmem>>, vector<40x256xf32>
    %c0_59 = arith.constant 0 : index
    %c0_60 = arith.constant 0 : index
    %101 = vector.load %arg4[%c0_59, %c0_60] : memref<128x256xf32, #tpu.memory_space<vmem>>, vector<128x256xf32>
    %102 = arith.index_cast %c3_i32 : i32 to index
    %c0_61 = arith.constant 0 : index
    %c0_62 = arith.constant 0 : index
    %103 = vector.load %arg1[%102, %c0_61, %c0_62] : memref<5x8x40xf32, #tpu.memory_space<vmem>>, vector<1x8x40xf32>
    %104 = vector.shape_cast %103 : vector<1x8x40xf32> to vector<8x40xf32>
    %cst_63 = arith.constant dense<0.000000e+00> : vector<8x256xf32>
    %105 = tpu.matmul %104, %100, %cst_63 {dimension_numbers = #tpu.dot_dimension_numbers<[1], [0], [0], [1], [0, 0, 1, 1], [], []>} : vector<8x40xf32>, vector<40x256xf32>, vector<8x256xf32> -> vector<8x256xf32>
    %cst_64 = arith.constant dense<0.000000e+00> : vector<8x256xf32>
    %106 = tpu.matmul %78, %101, %cst_64 {dimension_numbers = #tpu.dot_dimension_numbers<[1], [0], [0], [1], [0, 0, 1, 1], [], []>} : vector<8x128xf32>, vector<128x256xf32>, vector<8x256xf32> -> vector<8x256xf32>
    %107 = arith.addf %105, %106 : vector<8x256xf32>
    %c0_65 = arith.constant 0 : index
    %c0_66 = arith.constant 0 : index
    %108 = vector.load %arg6[%c0_65, %c0_66] : memref<1x256xf32, #tpu.memory_space<vmem>>, vector<1x256xf32>
    %109 = vector.broadcast %108 : vector<1x256xf32> to vector<8x256xf32>
    %110 = arith.addf %107, %109 : vector<8x256xf32>
    %111 = vector.extract_strided_slice %110 {offsets = [0, 0], sizes = [8, 128], strides = [1, 1]} : vector<8x256xf32> to vector<8x128xf32>
    %112 = vector.extract_strided_slice %110 {offsets = [0, 128], sizes = [8, 128], strides = [1, 1]} : vector<8x256xf32> to vector<8x128xf32>
    %c0_67 = arith.constant 0 : index
    %c0_68 = arith.constant 0 : index
    %113 = vector.load %arg5[%c0_67, %c0_68] : memref<128x128xf32, #tpu.memory_space<vmem>>, vector<128x128xf32>
    %cst_69 = arith.constant dense<0.000000e+00> : vector<8x128xf32>
    %114 = tpu.matmul %112, %113, %cst_69 {dimension_numbers = #tpu.dot_dimension_numbers<[1], [0], [0], [1], [0, 0, 1, 1], [], []>} : vector<8x128xf32>, vector<128x128xf32>, vector<8x128xf32> -> vector<8x128xf32>
    %c0_70 = arith.constant 0 : index
    %c0_71 = arith.constant 0 : index
    %115 = vector.load %arg7[%c0_70, %c0_71] : memref<1x128xf32, #tpu.memory_space<vmem>>, vector<1x128xf32>
    %116 = vector.broadcast %115 : vector<1x128xf32> to vector<8x128xf32>
    %117 = arith.addf %114, %116 : vector<8x128xf32>
    %cst_72 = arith.constant dense<0xFF800000> : vector<8xf32>
    %118 = vector.multi_reduction <maximumf>, %117, %cst_72 [1] : vector<8x128xf32> to vector<8xf32>
    %119 = vector.shape_cast %118 : vector<8xf32> to vector<8x1xf32>
    %120 = vector.broadcast %119 : vector<8x1xf32> to vector<8x128xf32>
    %121 = arith.subf %117, %120 : vector<8x128xf32>
    %122 = math.exp %121 : vector<8x128xf32>
    %cst_73 = arith.constant dense<0.000000e+00> : vector<8xf32>
    %123 = vector.multi_reduction <add>, %122, %cst_73 [1] : vector<8x128xf32> to vector<8xf32>
    %124 = vector.shape_cast %123 : vector<8xf32> to vector<8x1xf32>
    %125 = math.log %124 : vector<8x1xf32>
    %126 = arith.addf %119, %125 : vector<8x1xf32>
    %127 = vector.broadcast %126 : vector<8x1xf32> to vector<8x128xf32>
    %128 = arith.subf %117, %127 : vector<8x128xf32>
    %129 = arith.index_cast %c3_i32 : i32 to index
    %c0_74 = arith.constant 0 : index
    %c0_75 = arith.constant 0 : index
    %130 = vector.load %arg8[%129, %c0_74, %c0_75] : memref<5x8x128xf32, #tpu.memory_space<vmem>>, vector<1x8x128xf32>
    %131 = vector.shape_cast %130 : vector<1x8x128xf32> to vector<8x128xf32>
    %132 = vector.shape_cast %128 : vector<8x128xf32> to vector<1x8x128xf32>
    tpu.vector_store %arg8[%129, %c0_74, %c0_75], %132 {strides = array<i32>} : memref<5x8x128xf32, #tpu.memory_space<vmem>>, vector<1x8x128xf32>,
    %c4_i32 = arith.constant 4 : i32
    %c0_76 = arith.constant 0 : index
    %c0_77 = arith.constant 0 : index
    %133 = vector.load %arg3[%c0_76, %c0_77] : memref<40x256xf32, #tpu.memory_space<vmem>>, vector<40x256xf32>
    %c0_78 = arith.constant 0 : index
    %c0_79 = arith.constant 0 : index
    %134 = vector.load %arg4[%c0_78, %c0_79] : memref<128x256xf32, #tpu.memory_space<vmem>>, vector<128x256xf32>
    %135 = arith.index_cast %c4_i32 : i32 to index
    %c0_80 = arith.constant 0 : index
    %c0_81 = arith.constant 0 : index
    %136 = vector.load %arg1[%135, %c0_80, %c0_81] : memref<5x8x40xf32, #tpu.memory_space<vmem>>, vector<1x8x40xf32>
    %137 = vector.shape_cast %136 : vector<1x8x40xf32> to vector<8x40xf32>
    %cst_82 = arith.constant dense<0.000000e+00> : vector<8x256xf32>
    %138 = tpu.matmul %137, %133, %cst_82 {dimension_numbers = #tpu.dot_dimension_numbers<[1], [0], [0], [1], [0, 0, 1, 1], [], []>} : vector<8x40xf32>, vector<40x256xf32>, vector<8x256xf32> -> vector<8x256xf32>
    %cst_83 = arith.constant dense<0.000000e+00> : vector<8x256xf32>
    %139 = tpu.matmul %111, %134, %cst_83 {dimension_numbers = #tpu.dot_dimension_numbers<[1], [0], [0], [1], [0, 0, 1, 1], [], []>} : vector<8x128xf32>, vector<128x256xf32>, vector<8x256xf32> -> vector<8x256xf32>
    %140 = arith.addf %138, %139 : vector<8x256xf32>
    %c0_84 = arith.constant 0 : index
    %c0_85 = arith.constant 0 : index
    %141 = vector.load %arg6[%c0_84, %c0_85] : memref<1x256xf32, #tpu.memory_space<vmem>>, vector<1x256xf32>
    %142 = vector.broadcast %141 : vector<1x256xf32> to vector<8x256xf32>
    %143 = arith.addf %140, %142 : vector<8x256xf32>
    %144 = vector.extract_strided_slice %143 {offsets = [0, 0], sizes = [8, 128], strides = [1, 1]} : vector<8x256xf32> to vector<8x128xf32>
    %145 = vector.extract_strided_slice %143 {offsets = [0, 128], sizes = [8, 128], strides = [1, 1]} : vector<8x256xf32> to vector<8x128xf32>
    %c0_86 = arith.constant 0 : index
    %c0_87 = arith.constant 0 : index
    %146 = vector.load %arg5[%c0_86, %c0_87] : memref<128x128xf32, #tpu.memory_space<vmem>>, vector<128x128xf32>
    %cst_88 = arith.constant dense<0.000000e+00> : vector<8x128xf32>
    %147 = tpu.matmul %145, %146, %cst_88 {dimension_numbers = #tpu.dot_dimension_numbers<[1], [0], [0], [1], [0, 0, 1, 1], [], []>} : vector<8x128xf32>, vector<128x128xf32>, vector<8x128xf32> -> vector<8x128xf32>
    %c0_89 = arith.constant 0 : index
    %c0_90 = arith.constant 0 : index
    %148 = vector.load %arg7[%c0_89, %c0_90] : memref<1x128xf32, #tpu.memory_space<vmem>>, vector<1x128xf32>
    %149 = vector.broadcast %148 : vector<1x128xf32> to vector<8x128xf32>
    %150 = arith.addf %147, %149 : vector<8x128xf32>
    %cst_91 = arith.constant dense<0xFF800000> : vector<8xf32>
    %151 = vector.multi_reduction <maximumf>, %150, %cst_91 [1] : vector<8x128xf32> to vector<8xf32>
    %152 = vector.shape_cast %151 : vector<8xf32> to vector<8x1xf32>
    %153 = vector.broadcast %152 : vector<8x1xf32> to vector<8x128xf32>
    %154 = arith.subf %150, %153 : vector<8x128xf32>
    %155 = math.exp %154 : vector<8x128xf32>
    %cst_92 = arith.constant dense<0.000000e+00> : vector<8xf32>
    %156 = vector.multi_reduction <add>, %155, %cst_92 [1] : vector<8x128xf32> to vector<8xf32>
    %157 = vector.shape_cast %156 : vector<8xf32> to vector<8x1xf32>
    %158 = math.log %157 : vector<8x1xf32>
    %159 = arith.addf %152, %158 : vector<8x1xf32>
    %160 = vector.broadcast %159 : vector<8x1xf32> to vector<8x128xf32>
    %161 = arith.subf %150, %160 : vector<8x128xf32>
    %162 = arith.index_cast %c4_i32 : i32 to index
    %c0_93 = arith.constant 0 : index
    %c0_94 = arith.constant 0 : index
    %163 = vector.load %arg8[%162, %c0_93, %c0_94] : memref<5x8x128xf32, #tpu.memory_space<vmem>>, vector<1x8x128xf32>
    %164 = vector.shape_cast %163 : vector<1x8x128xf32> to vector<8x128xf32>
    %165 = vector.shape_cast %161 : vector<8x128xf32> to vector<1x8x128xf32>
    tpu.vector_store %arg8[%162, %c0_93, %c0_94], %165 {strides = array<i32>} : memref<5x8x128xf32, #tpu.memory_space<vmem>>, vector<1x8x128xf32>,
    %c5_i32 = arith.constant 5 : i32
    %c0_95 = arith.constant 0 : index
    %c0_96 = arith.constant 0 : index
    %166 = vector.load %arg9[%c0_95, %c0_96] : memref<8x128xf32, #tpu.memory_space<vmem>>, vector<8x128xf32>
    tpu.vector_store %arg9[%c0_95, %c0_96], %144 {strides = array<i32>} : memref<8x128xf32, #tpu.memory_space<vmem>>, vector<8x128xf32>,
    return
  }
  func.func @transform_0(%arg0: i32) -> (i32, i32, i32) {
    %c0_i32 = arith.constant 0 : i32
    %c0_i32_0 = arith.constant 0 : i32
    %c0_i32_1 = arith.constant 0 : i32
    return %c0_i32, %arg0, %c0_i32_0 : i32, i32, i32
  }
  func.func @transform_1(%arg0: i32) -> (i32, i32) {
    %c0_i32 = arith.constant 0 : i32
    %c0_i32_0 = arith.constant 0 : i32
    return %arg0, %c0_i32 : i32, i32
  }
  func.func @transform_2(%arg0: i32) -> (i32, i32) {
    %c0_i32 = arith.constant 0 : i32
    %c0_i32_0 = arith.constant 0 : i32
    %c0_i32_1 = arith.constant 0 : i32
    return %c0_i32, %c0_i32_0 : i32, i32
  }
  func.func @transform_3(%arg0: i32) -> (i32, i32) {
    %c0_i32 = arith.constant 0 : i32
    %c0_i32_0 = arith.constant 0 : i32
    %c0_i32_1 = arith.constant 0 : i32
    return %c0_i32, %c0_i32_0 : i32, i32
  }
  func.func @transform_4(%arg0: i32) -> (i32, i32) {
    %c0_i32 = arith.constant 0 : i32
    %c0_i32_0 = arith.constant 0 : i32
    %c0_i32_1 = arith.constant 0 : i32
    return %c0_i32, %c0_i32_0 : i32, i32
  }
  func.func @transform_5(%arg0: i32) -> (i32, i32) {
    %c0_i32 = arith.constant 0 : i32
    %c0_i32_0 = arith.constant 0 : i32
    %c0_i32_1 = arith.constant 0 : i32
    return %c0_i32, %c0_i32_0 : i32, i32
  }
  func.func @transform_6(%arg0: i32) -> (i32, i32) {
    %c0_i32 = arith.constant 0 : i32
    %c0_i32_0 = arith.constant 0 : i32
    %c0_i32_1 = arith.constant 0 : i32
    return %c0_i32, %c0_i32_0 : i32, i32
  }
  func.func @transform_7(%arg0: i32) -> (i32, i32, i32) {
    %c0_i32 = arith.constant 0 : i32
    %c0_i32_0 = arith.constant 0 : i32
    %c0_i32_1 = arith.constant 0 : i32
    return %c0_i32, %arg0, %c0_i32_0 : i32, i32, i32
  }
  func.func @transform_8(%arg0: i32) -> (i32, i32) {
    %c0_i32 = arith.constant 0 : i32
    %c0_i32_0 = arith.constant 0 : i32
    return %arg0, %c0_i32 : i32, i32
  }
}

</mosaic_0001>

<llo_original>
// kernel: tpu_custom_call.1
$region0: #{tpu_custom_call.1}
  #allocation0 [shape = 'u32[]', space=smem, size = 0x4, offset = 0x4, fixed_abs, tag = 'smem constant byte address 0x4 - core index']
  #allocation1 [shape = 'u32[144,128]{1,0:T(1,128)}', space=vmem, size = 0x12000, scoped, tag = 'internal scratch']
  %s0 = inlined_call_operand.hbm [shape: f32[5,8,40], index: 0, kind: input, shape index: {}]
  %s1 = inlined_call_operand.hbm [shape: f32[8,128], index: 1, kind: input, shape index: {}]
  %s2 = inlined_call_operand.hbm [shape: f32[40,256], index: 2, kind: input, shape index: {}]
  %s3 = inlined_call_operand.hbm [shape: f32[128,256], index: 3, kind: input, shape index: {}]
  %s4 = inlined_call_operand.hbm [shape: f32[128,128], index: 4, kind: input, shape index: {}]
  %s5 = inlined_call_operand.vmem [shape: f32[1,256], index: 5, kind: input, shape index: {}]
  %s6 = inlined_call_operand.vmem [shape: f32[1,128], index: 6, kind: input, shape index: {}]
  %s7 = inlined_call_operand.hbm [shape: f32[5,8,128], index: 7, kind: output, shape index: {0}]
  %s8 = inlined_call_operand.hbm [shape: f32[8,128], index: 8, kind: output, shape index: {1}]
  %9 = xla_tuple %s7, %s8
  %s10 = sld [smem:[#allocation0]]
  $region66: #{tpu_custom_call.1} parent=0
    _
  %s12 = ssub.s32 1, %s10
  %s13 = scalar_select 0, %s12, %s10
  $region1: #{tpu_custom_call.1} parent=0
    #allocation2 [shape = 'u8[20480]{0}', space=vmem, size = 0x5000, scoped, tag = 'input window, operand 0, single buffered']
    #allocation3 [shape = 's32[1]{0}', space=sflag, size = 0x4, scoped, tag = 'scoped memory for tpu_custom_call.1']
    #allocation4 [shape = 's32[1]{0}', space=sflag, size = 0x4, scoped, tag = 'scoped memory for tpu_custom_call.1']
    #allocation5 [shape = 'u8[4096]{0}', space=vmem, size = 0x1000, scoped, tag = 'input window, operand 1, single buffered']
    #allocation6 [shape = 's32[1]{0}', space=sflag, size = 0x4, scoped, tag = 'scoped memory for tpu_custom_call.1']
    #allocation7 [shape = 'u8[40960]{0}', space=vmem, size = 0xa000, scoped, tag = 'input window, operand 2, single buffered']
    #allocation8 [shape = 'u8[131072]{0}', space=vmem, size = 0x20000, scoped, tag = 'input window, operand 3, single buffered']
    #allocation9 [shape = 's32[1]{0}', space=sflag, size = 0x4, scoped, tag = 'scoped memory for tpu_custom_call.1']
    #allocation10 [shape = 'u8[65536]{0}', space=vmem, size = 0x10000, scoped, tag = 'input window, operand 4, single buffered']
    #allocation11 [shape = 'u8[20480]{0}', space=vmem, size = 0x5000, scoped, tag = 'output window, operand 0, single buffered']
    #allocation12 [shape = 'u8[4096]{0}', space=vmem, size = 0x1000, scoped, tag = 'output window, operand 1, single buffered']
    #allocation13 [shape = 's32[1]{0}', space=sflag, size = 0x4, scoped, tag = 'scoped memory for tpu_custom_call.1']
    %14 = vsyncpa [#allocation3], 0
    %15 = vsyncpa [#allocation6], 0
    %16 = vsyncpa [#allocation9], 0
    %17 = vsyncpa [#allocation4], 0
    %18 = vsyncpa [#allocation13], 0
    // Predicated region
    $region2: #{tpu_custom_call.1} parent=1 // pred_check
      _
    $region3: #{tpu_custom_call.1} parent=1 // pred_check_branch
      %20 = sbr.rel (0) target = $region5
    $region4: #{tpu_custom_call.1} parent=1 // pred_region
      %s22 = ssub.s32 640, 640
      %23 = vsyncadd [#allocation3], %s22
      %s24 = sshll.u32 [#allocation2], 4
      %s25 = int_to_ptr.vmem [resolvable:$true] %s24
      %30 = dma.hbm_to_vmem [thread:$0]  %s0, 640, %s25, [#allocation3], 128, 128, 8
    $region5: #{tpu_custom_call.1} parent=1 // pred_fallthru
      _
    // Predicated region
    $region6: #{tpu_custom_call.1} parent=1 // pred_check
      _
    $region7: #{tpu_custom_call.1} parent=1 // pred_check_branch
      %32 = sbr.rel (0) target = $region9
    $region8: #{tpu_custom_call.1} parent=1 // pred_region
      %s34 = ssub.s32 128, 128
      %35 = vsyncadd [#allocation6], %s34
      %s37 = sshll.u32 [#allocation5], 4
      %s38 = int_to_ptr.vmem [resolvable:$true] %s37
      %40 = dma.hbm_to_vmem [thread:$0]  %s1, 128, %s38, [#allocation6]
    $region9: #{tpu_custom_call.1} parent=1 // pred_fallthru
      _
    // Predicated region
    $region10: #{tpu_custom_call.1} parent=1 // pred_check
      _
    $region11: #{tpu_custom_call.1} parent=1 // pred_check_branch
      %42 = sbr.rel (0) target = $region13
    $region12: #{tpu_custom_call.1} parent=1 // pred_region
      %s44 = ssub.s32 1280, 1280
      %45 = vsyncadd [#allocation6], %s44
      %s46 = sshll.u32 [#allocation7], 4
      %s47 = int_to_ptr.vmem [resolvable:$true] %s46
      %52 = dma.hbm_to_vmem [thread:$0]  %s2, 1280, %s47, [#allocation6], 256, 256, 16
    $region13: #{tpu_custom_call.1} parent=1 // pred_fallthru
      _
    // Predicated region
    $region14: #{tpu_custom_call.1} parent=1 // pred_check
      _
    $region15: #{tpu_custom_call.1} parent=1 // pred_check_branch
      %54 = sbr.rel (0) target = $region17
    $region16: #{tpu_custom_call.1} parent=1 // pred_region
      %s56 = ssub.s32 4096, 4096
      %57 = vsyncadd [#allocation9], %s56
      %s58 = sshll.u32 [#allocation8], 4
      %s59 = int_to_ptr.vmem [resolvable:$true] %s58
      %64 = dma.hbm_to_vmem [thread:$0]  %s3, 4096, %s59, [#allocation9], 256, 256, 16
    $region17: #{tpu_custom_call.1} parent=1 // pred_fallthru
      _
    // Predicated region
    $region18: #{tpu_custom_call.1} parent=1 // pred_check
      _
    $region19: #{tpu_custom_call.1} parent=1 // pred_check_branch
      %66 = sbr.rel (0) target = $region21
    $region20: #{tpu_custom_call.1} parent=1 // pred_region
      %s68 = ssub.s32 2048, 2048
      %69 = vsyncadd [#allocation9], %s68
      %s70 = sshll.u32 [#allocation10], 4
      %s71 = int_to_ptr.vmem [resolvable:$true] %s70
      %76 = dma.hbm_to_vmem [thread:$0]  %s4, 2048, %s71, [#allocation9], 128, 128, 8
    $region21: #{tpu_custom_call.1} parent=1 // pred_fallthru
      _
    // Predicated region
    $region22: #{tpu_custom_call.1} parent=1 // pred_check
      _
    $region23: #{tpu_custom_call.1} parent=1 // pred_check_branch
      %78 = sbr.rel (0) target = $region25
    $region24: #{tpu_custom_call.1} parent=1 // pred_region
      _
    $region25: #{tpu_custom_call.1} parent=1 // pred_fallthru
      _
    // Predicated region
    $region26: #{tpu_custom_call.1} parent=1 // pred_check
      _
    $region27: #{tpu_custom_call.1} parent=1 // pred_check_branch
      %80 = sbr.rel (0) target = $region29
    $region28: #{tpu_custom_call.1} parent=1 // pred_region
      _
    $region29: #{tpu_custom_call.1} parent=1 // pred_fallthru
      _
    // Predicated region
    $region30: #{tpu_custom_call.1} parent=1 // pred_check
      _
    $region31: #{tpu_custom_call.1} parent=1 // pred_check_branch
      %82 = sbr.rel (0) target = $region33
    $region32: #{tpu_custom_call.1} parent=1 // pred_region
      %83 = dma.done [#allocation3], 640
    $region33: #{tpu_custom_call.1} parent=1 // pred_fallthru
      _
    // Predicated region
    $region34: #{tpu_custom_call.1} parent=1 // pred_check
      _
    $region35: #{tpu_custom_call.1} parent=1 // pred_check_branch
      %85 = sbr.rel (0) target = $region37
    $region36: #{tpu_custom_call.1} parent=1 // pred_region
      %86 = dma.done [#allocation6], 128
    $region37: #{tpu_custom_call.1} parent=1 // pred_fallthru
      _
    // Predicated region
    $region38: #{tpu_custom_call.1} parent=1 // pred_check
      _
    $region39: #{tpu_custom_call.1} parent=1 // pred_check_branch
      %88 = sbr.rel (0) target = $region41
    $region40: #{tpu_custom_call.1} parent=1 // pred_region
      %89 = dma.done [#allocation6], 1280
    $region41: #{tpu_custom_call.1} parent=1 // pred_fallthru
      _
    // Predicated region
    $region42: #{tpu_custom_call.1} parent=1 // pred_check
      _
    $region43: #{tpu_custom_call.1} parent=1 // pred_check_branch
      %91 = sbr.rel (0) target = $region45
    $region44: #{tpu_custom_call.1} parent=1 // pred_region
      %92 = dma.done [#allocation9], 4096
    $region45: #{tpu_custom_call.1} parent=1 // pred_fallthru
      _
    // Predicated region
    $region46: #{tpu_custom_call.1} parent=1 // pred_check
      _
    $region47: #{tpu_custom_call.1} parent=1 // pred_check_branch
      %94 = sbr.rel (0) target = $region49
    $region48: #{tpu_custom_call.1} parent=1 // pred_region
      %95 = dma.done [#allocation9], 2048
    $region49: #{tpu_custom_call.1} parent=1 // pred_fallthru
      _
    %v96 = vld [vmem:[#allocation5] sm:$0xff]
    %v97 = vld [vmem:[#allocation7] sm:$0xff]
    %v98 = vld [vmem:[#allocation7 + $0x8] sm:$0xff]
    %v99 = vld [vmem:[#allocation7 + $0x10] sm:$0xff]
    %v100 = vld [vmem:[#allocation7 + $0x18] sm:$0xff]
    %v101 = vld [vmem:[#allocation7 + $0x20] sm:$0xff]
    %v102 = vld [vmem:[#allocation7 + $0x28] sm:$0xff]
    %v103 = vld [vmem:[#allocation7 + $0x30] sm:$0xff]
    %v104 = vld [vmem:[#allocation7 + $0x38] sm:$0xff]
    %v105 = vld [vmem:[#allocation7 + $0x40] sm:$0xff]
    %v106 = vld [vmem:[#allocation7 + $0x48] sm:$0xff]
    %v107 = vld [vmem:[#allocation8] sm:$0xff]
    %v108 = vld [vmem:[#allocation8 + $0x8] sm:$0xff]
    %v109 = vld [vmem:[#allocation8 + $0x10] sm:$0xff]
    %v110 = vld [vmem:[#allocation8 + $0x18] sm:$0xff]
    %v111 = vld [vmem:[#allocation8 + $0x20] sm:$0xff]
    %v112 = vld [vmem:[#allocation8 + $0x28] sm:$0xff]
    %v113 = vld [vmem:[#allocation8 + $0x30] sm:$0xff]
    %v114 = vld [vmem:[#allocation8 + $0x38] sm:$0xff]
    %v115 = vld [vmem:[#allocation8 + $0x40] sm:$0xff]
    %v116 = vld [vmem:[#allocation8 + $0x48] sm:$0xff]
    %v117 = vld [vmem:[#allocation8 + $0x50] sm:$0xff]
    %v118 = vld [vmem:[#allocation8 + $0x58] sm:$0xff]
    %v119 = vld [vmem:[#allocation8 + $0x60] sm:$0xff]
    %v120 = vld [vmem:[#allocation8 + $0x68] sm:$0xff]
    %v121 = vld [vmem:[#allocation8 + $0x70] sm:$0xff]
    %v122 = vld [vmem:[#allocation8 + $0x78] sm:$0xff]
    %v123 = vld [vmem:[#allocation8 + $0x80] sm:$0xff]
    %v124 = vld [vmem:[#allocation8 + $0x88] sm:$0xff]
    %v125 = vld [vmem:[#allocation8 + $0x90] sm:$0xff]
    %v126 = vld [vmem:[#allocation8 + $0x98] sm:$0xff]
    %v127 = vld [vmem:[#allocation8 + $0xa0] sm:$0xff]
    %v128 = vld [vmem:[#allocation8 + $0xa8] sm:$0xff]
    %v129 = vld [vmem:[#allocation8 + $0xb0] sm:$0xff]
    %v130 = vld [vmem:[#allocation8 + $0xb8] sm:$0xff]
    %v131 = vld [vmem:[#allocation8 + $0xc0] sm:$0xff]
    %v132 = vld [vmem:[#allocation8 + $0xc8] sm:$0xff]
    %v133 = vld [vmem:[#allocation8 + $0xd0] sm:$0xff]
    %v134 = vld [vmem:[#allocation8 + $0xd8] sm:$0xff]
    %v135 = vld [vmem:[#allocation8 + $0xe0] sm:$0xff]
    %v136 = vld [vmem:[#allocation8 + $0xe8] sm:$0xff]
    %v137 = vld [vmem:[#allocation8 + $0xf0] sm:$0xff]
    %v138 = vld [vmem:[#allocation8 + $0xf8] sm:$0xff]
    %v139 = vld [vmem:[#allocation2] sm:$0xff]
    %140 = vmatprep.subr.mxu0 %v108
    %141 = vmatpush1.msra.mxu0 %v107
    %142 = vmatprep.subr.mxu0 %v110
    %143 = vmatpush1.msra.mxu0 %v109
    %144 = vmatprep.subr.mxu0 %v112
    %145 = vmatpush1.msra.mxu0 %v111
    %146 = vmatprep.subr.mxu0 %v114
    %147 = vmatpush1.msra.mxu0 %v113
    %148 = vmatprep.subr.mxu0 %v116
    %149 = vmatpush1.msra.mxu0 %v115
    %150 = vmatprep.subr.mxu0 %v118
    %151 = vmatpush1.msra.mxu0 %v117
    %152 = vmatprep.subr.mxu0 %v120
    %153 = vmatpush1.msra.mxu0 %v119
    %154 = vmatprep.subr.mxu0 %v122
    %155 = vmatpush1.msra.mxu0 %v121
    %156 = vmatprep.subr.mxu0 %v124
    %157 = vmatpush1.msra.mxu0 %v123
    %158 = vmatprep.subr.mxu0 %v126
    %159 = vmatpush1.msra.mxu0 %v125
    %160 = vmatprep.subr.mxu0 %v128
    %161 = vmatpush1.msra.mxu0 %v127
    %162 = vmatprep.subr.mxu0 %v130
    %163 = vmatpush1.msra.mxu0 %v129
    %164 = vmatprep.subr.mxu0 %v132
    %165 = vmatpush1.msra.mxu0 %v131
    %166 = vmatprep.subr.mxu0 %v134
    %167 = vmatpush1.msra.mxu0 %v133
    %168 = vmatprep.subr.mxu0 %v136
    %169 = vmatpush1.msra.mxu0 %v135
    %170 = vmatprep.subr.mxu0 %v138
    %171 = vmatpush1.msra.mxu0 %v137
    %172 = vmatprep.subr.mxu0 0.0
    %173 = vmatpush1.msra.mxu0 0.0
    %174 = vmatprep.subr.mxu0 0.0
    %175 = vmatpush1.msra.mxu0 0.0
    %176 = vmatprep.subr.mxu0 0.0
    %177 = vmatpush1.msra.mxu0 0.0
    %178 = vmatprep.subr.mxu0 0.0
    %179 = vmatpush1.msra.mxu0 0.0
    %180 = vmatprep.subr.mxu0 0.0
    %181 = vmatpush1.msra.mxu0 0.0
    %182 = vmatprep.subr.mxu0 0.0
    %183 = vmatpush1.msra.mxu0 0.0
    %184 = vmatprep.subr.mxu0 0.0
    %185 = vmatpush1.msra.mxu0 0.0
    %186 = vmatprep.subr.mxu0 0.0
    %187 = vmatpush1.msra.mxu0 0.0
    %188 = vmatprep.subr.mxu0 0.0
    %189 = vmatpush1.msra.mxu0 0.0
    %190 = vmatprep.subr.mxu0 0.0
    %191 = vmatpush1.msra.mxu0 0.0
    %192 = vmatprep.subr.mxu0 0.0
    %193 = vmatpush1.msra.mxu0 0.0
    %194 = vmatprep.subr.mxu0 0.0
    %195 = vmatpush1.msra.mxu0 0.0
    %196 = vmatprep.subr.mxu0 0.0
    %197 = vmatpush1.msra.mxu0 0.0
    %198 = vmatprep.subr.mxu0 0.0
    %199 = vmatpush1.msra.mxu0 0.0
    %200 = vmatprep.subr.mxu0 0.0
    %201 = vmatpush1.msra.mxu0 0.0
    %202 = vmatprep.subr.mxu0 0.0
    %203 = vmatpush1.msra.mxu0 0.0
    %204 = vmatprep.mubr.f32.mxu0 0.0
    %205 = vmatmul.mubr.f32.gmra.mrb[0].mxu0 %v96
    %v206 = vpop.f32.mrb[0].mxu0
    %v207 = vadd.f32 0.0, %v206
    %v208 = vpop.f32.mrb[0].mxu0
    %v209 = vadd.f32 0.0, %v208
    %210 = vdwg.mxu0
    %vm211 = vcmask 326656
    %v213 = vsel %vm211, %v139, 0
    %215 = vmatprep.subr.mxu0 %v98
    %216 = vmatpush1.msra.mxu0 %v97
    %217 = vmatprep.subr.mxu0 %v100
    %218 = vmatpush1.msra.mxu0 %v99
    %219 = vmatprep.subr.mxu0 %v102
    %220 = vmatpush1.msra.mxu0 %v101
    %221 = vmatprep.subr.mxu0 %v104
    %222 = vmatpush1.msra.mxu0 %v103
    %223 = vmatprep.subr.mxu0 %v106
    %224 = vmatpush1.msra.mxu0 %v105
    %225 = vmatprep.subr.mxu0 0.0
    %226 = vmatpush1.msra.mxu0 0.0
    %227 = vmatprep.subr.mxu0 0.0
    %228 = vmatpush1.msra.mxu0 0.0
    %229 = vmatprep.subr.mxu0 0.0
    %230 = vmatpush1.msra.mxu0 0.0
    %231 = vmatprep.subr.mxu0 0.0
    %232 = vmatpush1.msra.mxu0 0.0
    %233 = vmatprep.subr.mxu0 0.0
    %234 = vmatpush1.msra.mxu0 0.0
    %235 = vmatprep.subr.mxu0 0.0
    %236 = vmatpush1.msra.mxu0 0.0
    %237 = vmatprep.subr.mxu0 0.0
    %238 = vmatpush1.msra.mxu0 0.0
    %239 = vmatprep.subr.mxu0 0.0
    %240 = vmatpush1.msra.mxu0 0.0
    %241 = vmatprep.subr.mxu0 0.0
    %242 = vmatpush1.msra.mxu0 0.0
    %243 = vmatprep.subr.mxu0 0.0
    %244 = vmatpush1.msra.mxu0 0.0
    %245 = vmatprep.subr.mxu0 0.0
    %246 = vmatpush1.msra.mxu0 0.0
    %247 = vmatprep.subr.mxu0 0.0
    %248 = vmatpush1.msra.mxu0 0.0
    %249 = vmatprep.subr.mxu0 0.0
    %250 = vmatpush1.msra.mxu0 0.0
    %251 = vmatprep.subr.mxu0 0.0
    %252 = vmatpush1.msra.mxu0 0.0
    %253 = vmatprep.subr.mxu0 0.0
    %254 = vmatpush1.msra.mxu0 0.0
    %255 = vmatprep.subr.mxu0 0.0
    %256 = vmatpush1.msra.mxu0 0.0
    %257 = vmatprep.subr.mxu0 0.0
    %258 = vmatpush1.msra.mxu0 0.0
    %259 = vmatprep.subr.mxu0 0.0
    %260 = vmatpush1.msra.mxu0 0.0
    %261 = vmatprep.subr.mxu0 0.0
    %262 = vmatpush1.msra.mxu0 0.0
    %263 = vmatprep.subr.mxu0 0.0
    %264 = vmatpush1.msra.mxu0 0.0
    %265 = vmatprep.subr.mxu0 0.0
    %266 = vmatpush1.msra.mxu0 0.0
    %267 = vmatprep.subr.mxu0 0.0
    %268 = vmatpush1.msra.mxu0 0.0
    %269 = vmatprep.subr.mxu0 0.0
    %270 = vmatpush1.msra.mxu0 0.0
    %271 = vmatprep.subr.mxu0 0.0
    %272 = vmatpush1.msra.mxu0 0.0
    %273 = vmatprep.subr.mxu0 0.0
    %274 = vmatpush1.msra.mxu0 0.0
    %275 = vmatprep.subr.mxu0 0.0
    %276 = vmatpush1.msra.mxu0 0.0
    %277 = vmatprep.subr.mxu0 0.0
    %278 = vmatpush1.msra.mxu0 0.0
    %279 = vmatprep.mubr.f32.mxu0 0.0
    %280 = vmatmul.mubr.f32.gmra.mrb[0].mxu0 %v213
    %v281 = vpop.f32.mrb[0].mxu0
    %v282 = vadd.f32 %v207, %v281
    %v283 = vpop.f32.mrb[0].mxu0
    %v284 = vadd.f32 %v209, %v283
    %285 = vdwg.mxu0
    %v286 = vld [vmem:[%s5] sm:$0x3]
    %v288 = vlaneseq
    %v289 = vshrl.u32 %v288, 7
    %v290 = vsub.s32 0, %v289
    %v291 = vrot.slane %v286, %v290
    %v292 = vlaneseq
    %v293 = vshrl.u32 %v292, 7
    %v294 = vsub.s32 1, %v293
    %v295 = vrot.slane %v286, %v294
    %v298 = vadd.f32 %v282, %v291
    %v299 = vadd.f32 %v284, %v295
    %v300 = vld [vmem:[#allocation10] sm:$0xff]
    %v301 = vld [vmem:[#allocation10 + $0x8] sm:$0xff]
    %v302 = vld [vmem:[#allocation10 + $0x10] sm:$0xff]
    %v303 = vld [vmem:[#allocation10 + $0x18] sm:$0xff]
    %v304 = vld [vmem:[#allocation10 + $0x20] sm:$0xff]
    %v305 = vld [vmem:[#allocation10 + $0x28] sm:$0xff]
    %v306 = vld [vmem:[#allocation10 + $0x30] sm:$0xff]
    %v307 = vld [vmem:[#allocation10 + $0x38] sm:$0xff]
    %v308 = vld [vmem:[#allocation10 + $0x40] sm:$0xff]
    %v309 = vld [vmem:[#allocation10 + $0x48] sm:$0xff]
    %v310 = vld [vmem:[#allocation10 + $0x50] sm:$0xff]
    %v311 = vld [vmem:[#allocation10 + $0x58] sm:$0xff]
    %v312 = vld [vmem:[#allocation10 + $0x60] sm:$0xff]
    %v313 = vld [vmem:[#allocation10 + $0x68] sm:$0xff]
    %v314 = vld [vmem:[#allocation10 + $0x70] sm:$0xff]
    %v315 = vld [vmem:[#allocation10 + $0x78] sm:$0xff]
    %v316 = vld [vmem:[%s6] sm:$0x1]
    %v318 = vlaneseq
    %v319 = vshrl.u32 %v318, 7
    %v320 = vsub.s32 0, %v319
    %v321 = vrot.slane %v316, %v320
    %323 = vmatprep.subr.mxu0 0.0
    %324 = vmatpush1.msra.mxu0 %v300
    %325 = vmatprep.subr.mxu0 0.0
    %326 = vmatpush1.msra.mxu0 %v301
    %327 = vmatprep.subr.mxu0 0.0
    %328 = vmatpush1.msra.mxu0 %v302
    %329 = vmatprep.subr.mxu0 0.0
    %330 = vmatpush1.msra.mxu0 %v303
    %331 = vmatprep.subr.mxu0 0.0
    %332 = vmatpush1.msra.mxu0 %v304
    %333 = vmatprep.subr.mxu0 0.0
    %334 = vmatpush1.msra.mxu0 %v305
    %335 = vmatprep.subr.mxu0 0.0
    %336 = vmatpush1.msra.mxu0 %v306
    %337 = vmatprep.subr.mxu0 0.0
    %338 = vmatpush1.msra.mxu0 %v307
    %339 = vmatprep.subr.mxu0 0.0
    %340 = vmatpush1.msra.mxu0 %v308
    %341 = vmatprep.subr.mxu0 0.0
    %342 = vmatpush1.msra.mxu0 %v309
    %343 = vmatprep.subr.mxu0 0.0
    %344 = vmatpush1.msra.mxu0 %v310
    %345 = vmatprep.subr.mxu0 0.0
    %346 = vmatpush1.msra.mxu0 %v311
    %347 = vmatprep.subr.mxu0 0.0
    %348 = vmatpush1.msra.mxu0 %v312
    %349 = vmatprep.subr.mxu0 0.0
    %350 = vmatpush1.msra.mxu0 %v313
    %351 = vmatprep.subr.mxu0 0.0
    %352 = vmatpush1.msra.mxu0 %v314
    %353 = vmatprep.subr.mxu0 0.0
    %354 = vmatpush1.msra.mxu0 %v315
    %355 = vmatprep.subr.mxu0 0.0
    %356 = vmatpush1.msra.mxu0 0.0
    %357 = vmatprep.subr.mxu0 0.0
    %358 = vmatpush1.msra.mxu0 0.0
    %359 = vmatprep.subr.mxu0 0.0
    %360 = vmatpush1.msra.mxu0 0.0
    %361 = vmatprep.subr.mxu0 0.0
    %362 = vmatpush1.msra.mxu0 0.0
    %363 = vmatprep.subr.mxu0 0.0
    %364 = vmatpush1.msra.mxu0 0.0
    %365 = vmatprep.subr.mxu0 0.0
    %366 = vmatpush1.msra.mxu0 0.0
    %367 = vmatprep.subr.mxu0 0.0
    %368 = vmatpush1.msra.mxu0 0.0
    %369 = vmatprep.subr.mxu0 0.0
    %370 = vmatpush1.msra.mxu0 0.0
    %371 = vmatprep.subr.mxu0 0.0
    %372 = vmatpush1.msra.mxu0 0.0
    %373 = vmatprep.subr.mxu0 0.0
    %374 = vmatpush1.msra.mxu0 0.0
    %375 = vmatprep.subr.mxu0 0.0
    %376 = vmatpush1.msra.mxu0 0.0
    %377 = vmatprep.subr.mxu0 0.0
    %378 = vmatpush1.msra.mxu0 0.0
    %379 = vmatprep.subr.mxu0 0.0
    %380 = vmatpush1.msra.mxu0 0.0
    %381 = vmatprep.subr.mxu0 0.0
    %382 = vmatpush1.msra.mxu0 0.0
    %383 = vmatprep.subr.mxu0 0.0
    %384 = vmatpush1.msra.mxu0 0.0
    %385 = vmatprep.subr.mxu0 0.0
    %386 = vmatpush1.msra.mxu0 0.0
    %387 = vmatprep.mubr.f32.mxu0 0.0
    %388 = vmatmul.mubr.f32.gmra.mrb[0].mxu0 %v299
    %v389 = vpop.f32.mrb[0].mxu0
    %v390 = vadd.f32 %v321, %v389
    %v391 = vpop.f32.mrb[0].mxu0
    %392 = vdwg.mxu0
    %393 = vmax.xlane.f32.xlu0 %v390
    %v394 = vpop.xlane.xlu0 %393
    %v395 = vsub.f32 %v390, %v394
    %v396 = vmul.f32 %v395, 1.442695
    %v397 = vpow.pop %v396
    %398 = vadd.xlane.f32.xlu0 %v397
    %v399 = vpop.xlane.xlu0 %398
    %v400 = vlog2.pop %v399
    %v401 = vmul.f32 %v400, 0.6931472
    %v402 = vadd.f32 %v394, %v401
    %v403 = vsub.f32 %v390, %v402
    %404 = vst [vmem:[#allocation11] sm:$0xff] %v403
    %v405 = vld [vmem:[#allocation7] sm:$0xff]
    %v406 = vld [vmem:[#allocation7 + $0x8] sm:$0xff]
    %v407 = vld [vmem:[#allocation7 + $0x10] sm:$0xff]
    %v408 = vld [vmem:[#allocation7 + $0x18] sm:$0xff]
    %v409 = vld [vmem:[#allocation7 + $0x20] sm:$0xff]
    %v410 = vld [vmem:[#allocation7 + $0x28] sm:$0xff]
    %v411 = vld [vmem:[#allocation7 + $0x30] sm:$0xff]
    %v412 = vld [vmem:[#allocation7 + $0x38] sm:$0xff]
    %v413 = vld [vmem:[#allocation7 + $0x40] sm:$0xff]
    %v414 = vld [vmem:[#allocation7 + $0x48] sm:$0xff]
    %v415 = vld [vmem:[#allocation8] sm:$0xff]
    %v416 = vld [vmem:[#allocation8 + $0x8] sm:$0xff]
    %v417 = vld [vmem:[#allocation8 + $0x10] sm:$0xff]
    %v418 = vld [vmem:[#allocation8 + $0x18] sm:$0xff]
    %v419 = vld [vmem:[#allocation8 + $0x20] sm:$0xff]
    %v420 = vld [vmem:[#allocation8 + $0x28] sm:$0xff]
    %v421 = vld [vmem:[#allocation8 + $0x30] sm:$0xff]
    %v422 = vld [vmem:[#allocation8 + $0x38] sm:$0xff]
    %v423 = vld [vmem:[#allocation8 + $0x40] sm:$0xff]
    %v424 = vld [vmem:[#allocation8 + $0x48] sm:$0xff]
    %v425 = vld [vmem:[#allocation8 + $0x50] sm:$0xff]
    %v426 = vld [vmem:[#allocation8 + $0x58] sm:$0xff]
    %v427 = vld [vmem:[#allocation8 + $0x60] sm:$0xff]
    %v428 = vld [vmem:[#allocation8 + $0x68] sm:$0xff]
    %v429 = vld [vmem:[#allocation8 + $0x70] sm:$0xff]
    %v430 = vld [vmem:[#allocation8 + $0x78] sm:$0xff]
    %v431 = vld [vmem:[#allocation8 + $0x80] sm:$0xff]
    %v432 = vld [vmem:[#allocation8 + $0x88] sm:$0xff]
    %v433 = vld [vmem:[#allocation8 + $0x90] sm:$0xff]
    %v434 = vld [vmem:[#allocation8 + $0x98] sm:$0xff]
    %v435 = vld [vmem:[#allocation8 + $0xa0] sm:$0xff]
    %v436 = vld [vmem:[#allocation8 + $0xa8] sm:$0xff]
    %v437 = vld [vmem:[#allocation8 + $0xb0] sm:$0xff]
    %v438 = vld [vmem:[#allocation8 + $0xb8] sm:$0xff]
    %v439 = vld [vmem:[#allocation8 + $0xc0] sm:$0xff]
    %v440 = vld [vmem:[#allocation8 + $0xc8] sm:$0xff]
    %v441 = vld [vmem:[#allocation8 + $0xd0] sm:$0xff]
    %v442 = vld [vmem:[#allocation8 + $0xd8] sm:$0xff]
    %v443 = vld [vmem:[#allocation8 + $0xe0] sm:$0xff]
    %v444 = vld [vmem:[#allocation8 + $0xe8] sm:$0xff]
    %v445 = vld [vmem:[#allocation8 + $0xf0] sm:$0xff]
    %v446 = vld [vmem:[#allocation8 + $0xf8] sm:$0xff]
    %s447 = scalar_lea.vmem [#allocation2], 8
    %v448 = vld [vmem:[%s447] sm:$0xff]
    %449 = vmatprep.subr.mxu0 %v416
    %450 = vmatpush1.msra.mxu0 %v415
    %451 = vmatprep.subr.mxu0 %v418
    %452 = vmatpush1.msra.mxu0 %v417
    %453 = vmatprep.subr.mxu0 %v420
    %454 = vmatpush1.msra.mxu0 %v419
    %455 = vmatprep.subr.mxu0 %v422
    %456 = vmatpush1.msra.mxu0 %v421
    %457 = vmatprep.subr.mxu0 %v424
    %458 = vmatpush1.msra.mxu0 %v423
    %459 = vmatprep.subr.mxu0 %v426
    %460 = vmatpush1.msra.mxu0 %v425
    %461 = vmatprep.subr.mxu0 %v428
    %462 = vmatpush1.msra.mxu0 %v427
    %463 = vmatprep.subr.mxu0 %v430
    %464 = vmatpush1.msra.mxu0 %v429
    %465 = vmatprep.subr.mxu0 %v432
    %466 = vmatpush1.msra.mxu0 %v431
    %467 = vmatprep.subr.mxu0 %v434
    %468 = vmatpush1.msra.mxu0 %v433
    %469 = vmatprep.subr.mxu0 %v436
    %470 = vmatpush1.msra.mxu0 %v435
    %471 = vmatprep.subr.mxu0 %v438
    %472 = vmatpush1.msra.mxu0 %v437
    %473 = vmatprep.subr.mxu0 %v440
    %474 = vmatpush1.msra.mxu0 %v439
    %475 = vmatprep.subr.mxu0 %v442
    %476 = vmatpush1.msra.mxu0 %v441
    %477 = vmatprep.subr.mxu0 %v444
    %478 = vmatpush1.msra.mxu0 %v443
    %479 = vmatprep.subr.mxu0 %v446
    %480 = vmatpush1.msra.mxu0 %v445
    %481 = vmatprep.subr.mxu0 0.0
    %482 = vmatpush1.msra.mxu0 0.0
    %483 = vmatprep.subr.mxu0 0.0
    %484 = vmatpush1.msra.mxu0 0.0
    %485 = vmatprep.subr.mxu0 0.0
    %486 = vmatpush1.msra.mxu0 0.0
    %487 = vmatprep.subr.mxu0 0.0
    %488 = vmatpush1.msra.mxu0 0.0
    %489 = vmatprep.subr.mxu0 0.0
    %490 = vmatpush1.msra.mxu0 0.0
    %491 = vmatprep.subr.mxu0 0.0
    %492 = vmatpush1.msra.mxu0 0.0
    %493 = vmatprep.subr.mxu0 0.0
    %494 = vmatpush1.msra.mxu0 0.0
    %495 = vmatprep.subr.mxu0 0.0
    %496 = vmatpush1.msra.mxu0 0.0
    %497 = vmatprep.subr.mxu0 0.0
    %498 = vmatpush1.msra.mxu0 0.0
    %499 = vmatprep.subr.mxu0 0.0
    %500 = vmatpush1.msra.mxu0 0.0
    %501 = vmatprep.subr.mxu0 0.0
    %502 = vmatpush1.msra.mxu0 0.0
    %503 = vmatprep.subr.mxu0 0.0
    %504 = vmatpush1.msra.mxu0 0.0
    %505 = vmatprep.subr.mxu0 0.0
    %506 = vmatpush1.msra.mxu0 0.0
    %507 = vmatprep.subr.mxu0 0.0
    %508 = vmatpush1.msra.mxu0 0.0
    %509 = vmatprep.subr.mxu0 0.0
    %510 = vmatpush1.msra.mxu0 0.0
    %511 = vmatprep.subr.mxu0 0.0
    %512 = vmatpush1.msra.mxu0 0.0
    %513 = vmatprep.mubr.f32.mxu0 0.0
    %514 = vmatmul.mubr.f32.gmra.mrb[0].mxu0 %v298
    %v515 = vpop.f32.mrb[0].mxu0
    %v516 = vadd.f32 0.0, %v515
    %v517 = vpop.f32.mrb[0].mxu0
    %v518 = vadd.f32 0.0, %v517
    %519 = vdwg.mxu0
    %v521 = vsel %vm211, %v448, 0
    %523 = vmatprep.subr.mxu0 %v406
    %524 = vmatpush1.msra.mxu0 %v405
    %525 = vmatprep.subr.mxu0 %v408
    %526 = vmatpush1.msra.mxu0 %v407
    %527 = vmatprep.subr.mxu0 %v410
    %528 = vmatpush1.msra.mxu0 %v409
    %529 = vmatprep.subr.mxu0 %v412
    %530 = vmatpush1.msra.mxu0 %v411
    %531 = vmatprep.subr.mxu0 %v414
    %532 = vmatpush1.msra.mxu0 %v413
    %533 = vmatprep.subr.mxu0 0.0
    %534 = vmatpush1.msra.mxu0 0.0
    %535 = vmatprep.subr.mxu0 0.0
    %536 = vmatpush1.msra.mxu0 0.0
    %537 = vmatprep.subr.mxu0 0.0
    %538 = vmatpush1.msra.mxu0 0.0
    %539 = vmatprep.subr.mxu0 0.0
    %540 = vmatpush1.msra.mxu0 0.0
    %541 = vmatprep.subr.mxu0 0.0
    %542 = vmatpush1.msra.mxu0 0.0
    %543 = vmatprep.subr.mxu0 0.0
    %544 = vmatpush1.msra.mxu0 0.0
    %545 = vmatprep.subr.mxu0 0.0
    %546 = vmatpush1.msra.mxu0 0.0
    %547 = vmatprep.subr.mxu0 0.0
    %548 = vmatpush1.msra.mxu0 0.0
    %549 = vmatprep.subr.mxu0 0.0
    %550 = vmatpush1.msra.mxu0 0.0
    %551 = vmatprep.subr.mxu0 0.0
    %552 = vmatpush1.msra.mxu0 0.0
    %553 = vmatprep.subr.mxu0 0.0
    %554 = vmatpush1.msra.mxu0 0.0
    %555 = vmatprep.subr.mxu0 0.0
    %556 = vmatpush1.msra.mxu0 0.0
    %557 = vmatprep.subr.mxu0 0.0
    %558 = vmatpush1.msra.mxu0 0.0
    %559 = vmatprep.subr.mxu0 0.0
    %560 = vmatpush1.msra.mxu0 0.0
    %561 = vmatprep.subr.mxu0 0.0
    %562 = vmatpush1.msra.mxu0 0.0
    %563 = vmatprep.subr.mxu0 0.0
    %564 = vmatpush1.msra.mxu0 0.0
    %565 = vmatprep.subr.mxu0 0.0
    %566 = vmatpush1.msra.mxu0 0.0
    %567 = vmatprep.subr.mxu0 0.0
    %568 = vmatpush1.msra.mxu0 0.0
    %569 = vmatprep.subr.mxu0 0.0
    %570 = vmatpush1.msra.mxu0 0.0
    %571 = vmatprep.subr.mxu0 0.0
    %572 = vmatpush1.msra.mxu0 0.0
    %573 = vmatprep.subr.mxu0 0.0
    %574 = vmatpush1.msra.mxu0 0.0
    %575 = vmatprep.subr.mxu0 0.0
    %576 = vmatpush1.msra.mxu0 0.0
    %577 = vmatprep.subr.mxu0 0.0
    %578 = vmatpush1.msra.mxu0 0.0
    %579 = vmatprep.subr.mxu0 0.0
    %580 = vmatpush1.msra.mxu0 0.0
    %581 = vmatprep.subr.mxu0 0.0
    %582 = vmatpush1.msra.mxu0 0.0
    %583 = vmatprep.subr.mxu0 0.0
    %584 = vmatpush1.msra.mxu0 0.0
    %585 = vmatprep.subr.mxu0 0.0
    %586 = vmatpush1.msra.mxu0 0.0
    %587 = vmatprep.mubr.f32.mxu0 0.0
    %588 = vmatmul.mubr.f32.gmra.mrb[0].mxu0 %v521
    %v589 = vpop.f32.mrb[0].mxu0
    %v590 = vadd.f32 %v516, %v589
    %v591 = vpop.f32.mrb[0].mxu0
    %v592 = vadd.f32 %v518, %v591
    %593 = vdwg.mxu0
    %v594 = vld [vmem:[%s5] sm:$0x3]
    %v596 = vlaneseq
    %v597 = vshrl.u32 %v596, 7
    %v598 = vsub.s32 0, %v597
    %v599 = vrot.slane %v594, %v598
    %v600 = vlaneseq
    %v601 = vshrl.u32 %v600, 7
    %v602 = vsub.s32 1, %v601
    %v603 = vrot.slane %v594, %v602
    %v606 = vadd.f32 %v590, %v599
    %v607 = vadd.f32 %v592, %v603
    %v608 = vld [vmem:[#allocation10] sm:$0xff]
    %v609 = vld [vmem:[#allocation10 + $0x8] sm:$0xff]
    %v610 = vld [vmem:[#allocation10 + $0x10] sm:$0xff]
    %v611 = vld [vmem:[#allocation10 + $0x18] sm:$0xff]
    %v612 = vld [vmem:[#allocation10 + $0x20] sm:$0xff]
    %v613 = vld [vmem:[#allocation10 + $0x28] sm:$0xff]
    %v614 = vld [vmem:[#allocation10 + $0x30] sm:$0xff]
    %v615 = vld [vmem:[#allocation10 + $0x38] sm:$0xff]
    %v616 = vld [vmem:[#allocation10 + $0x40] sm:$0xff]
    %v617 = vld [vmem:[#allocation10 + $0x48] sm:$0xff]
    %v618 = vld [vmem:[#allocation10 + $0x50] sm:$0xff]
    %v619 = vld [vmem:[#allocation10 + $0x58] sm:$0xff]
    %v620 = vld [vmem:[#allocation10 + $0x60] sm:$0xff]
    %v621 = vld [vmem:[#allocation10 + $0x68] sm:$0xff]
    %v622 = vld [vmem:[#allocation10 + $0x70] sm:$0xff]
    %v623 = vld [vmem:[#allocation10 + $0x78] sm:$0xff]
    %v624 = vld [vmem:[%s6] sm:$0x1]
    %v626 = vlaneseq
    %v627 = vshrl.u32 %v626, 7
    %v628 = vsub.s32 0, %v627
    %v629 = vrot.slane %v624, %v628
    %631 = vmatprep.subr.mxu0 0.0
    %632 = vmatpush1.msra.mxu0 %v608
    %633 = vmatprep.subr.mxu0 0.0
    %634 = vmatpush1.msra.mxu0 %v609
    %635 = vmatprep.subr.mxu0 0.0
    %636 = vmatpush1.msra.mxu0 %v610
    %637 = vmatprep.subr.mxu0 0.0
    %638 = vmatpush1.msra.mxu0 %v611
    %639 = vmatprep.subr.mxu0 0.0
    %640 = vmatpush1.msra.mxu0 %v612
    %641 = vmatprep.subr.mxu0 0.0
    %642 = vmatpush1.msra.mxu0 %v613
    %643 = vmatprep.subr.mxu0 0.0
    %644 = vmatpush1.msra.mxu0 %v614
    %645 = vmatprep.subr.mxu0 0.0
    %646 = vmatpush1.msra.mxu0 %v615
    %647 = vmatprep.subr.mxu0 0.0
    %648 = vmatpush1.msra.mxu0 %v616
    %649 = vmatprep.subr.mxu0 0.0
    %650 = vmatpush1.msra.mxu0 %v617
    %651 = vmatprep.subr.mxu0 0.0
    %652 = vmatpush1.msra.mxu0 %v618
    %653 = vmatprep.subr.mxu0 0.0
    %654 = vmatpush1.msra.mxu0 %v619
    %655 = vmatprep.subr.mxu0 0.0
    %656 = vmatpush1.msra.mxu0 %v620
    %657 = vmatprep.subr.mxu0 0.0
    %658 = vmatpush1.msra.mxu0 %v621
    %659 = vmatprep.subr.mxu0 0.0
    %660 = vmatpush1.msra.mxu0 %v622
    %661 = vmatprep.subr.mxu0 0.0
    %662 = vmatpush1.msra.mxu0 %v623
    %663 = vmatprep.subr.mxu0 0.0
    %664 = vmatpush1.msra.mxu0 0.0
    %665 = vmatprep.subr.mxu0 0.0
    %666 = vmatpush1.msra.mxu0 0.0
    %667 = vmatprep.subr.mxu0 0.0
    %668 = vmatpush1.msra.mxu0 0.0
    %669 = vmatprep.subr.mxu0 0.0
    %670 = vmatpush1.msra.mxu0 0.0
    %671 = vmatprep.subr.mxu0 0.0
    %672 = vmatpush1.msra.mxu0 0.0
    %673 = vmatprep.subr.mxu0 0.0
    %674 = vmatpush1.msra.mxu0 0.0
    %675 = vmatprep.subr.mxu0 0.0
    %676 = vmatpush1.msra.mxu0 0.0
    %677 = vmatprep.subr.mxu0 0.0
    %678 = vmatpush1.msra.mxu0 0.0
    %679 = vmatprep.subr.mxu0 0.0
    %680 = vmatpush1.msra.mxu0 0.0
    %681 = vmatprep.subr.mxu0 0.0
    %682 = vmatpush1.msra.mxu0 0.0
    %683 = vmatprep.subr.mxu0 0.0
    %684 = vmatpush1.msra.mxu0 0.0
    %685 = vmatprep.subr.mxu0 0.0
    %686 = vmatpush1.msra.mxu0 0.0
    %687 = vmatprep.subr.mxu0 0.0
    %688 = vmatpush1.msra.mxu0 0.0
    %689 = vmatprep.subr.mxu0 0.0
    %690 = vmatpush1.msra.mxu0 0.0
    %691 = vmatprep.subr.mxu0 0.0
    %692 = vmatpush1.msra.mxu0 0.0
    %693 = vmatprep.subr.mxu0 0.0
    %694 = vmatpush1.msra.mxu0 0.0
    %695 = vmatprep.mubr.f32.mxu0 0.0
    %696 = vmatmul.mubr.f32.gmra.mrb[0].mxu0 %v607
    %v697 = vpop.f32.mrb[0].mxu0
    %v698 = vadd.f32 %v629, %v697
    %v699 = vpop.f32.mrb[0].mxu0
    %700 = vdwg.mxu0
    %701 = vmax.xlane.f32.xlu0 %v698
    %v702 = vpop.xlane.xlu0 %701
    %v703 = vsub.f32 %v698, %v702
    %v704 = vmul.f32 %v703, 1.442695
    %v705 = vpow.pop %v704
    %706 = vadd.xlane.f32.xlu0 %v705
    %v707 = vpop.xlane.xlu0 %706
    %v708 = vlog2.pop %v707
    %v709 = vmul.f32 %v708, 0.6931472
    %v710 = vadd.f32 %v702, %v709
    %v711 = vsub.f32 %v698, %v710
    %s712 = scalar_lea.vmem [#allocation11], 8
    %713 = vst [vmem:[%s712] sm:$0xff] %v711
    %v714 = vld [vmem:[#allocation7] sm:$0xff]
    %v715 = vld [vmem:[#allocation7 + $0x8] sm:$0xff]
    %v716 = vld [vmem:[#allocation7 + $0x10] sm:$0xff]
    %v717 = vld [vmem:[#allocation7 + $0x18] sm:$0xff]
    %v718 = vld [vmem:[#allocation7 + $0x20] sm:$0xff]
    %v719 = vld [vmem:[#allocation7 + $0x28] sm:$0xff]
    %v720 = vld [vmem:[#allocation7 + $0x30] sm:$0xff]
    %v721 = vld [vmem:[#allocation7 + $0x38] sm:$0xff]
    %v722 = vld [vmem:[#allocation7 + $0x40] sm:$0xff]
    %v723 = vld [vmem:[#allocation7 + $0x48] sm:$0xff]
    %v724 = vld [vmem:[#allocation8] sm:$0xff]
    %v725 = vld [vmem:[#allocation8 + $0x8] sm:$0xff]
    %v726 = vld [vmem:[#allocation8 + $0x10] sm:$0xff]
    %v727 = vld [vmem:[#allocation8 + $0x18] sm:$0xff]
    %v728 = vld [vmem:[#allocation8 + $0x20] sm:$0xff]
    %v729 = vld [vmem:[#allocation8 + $0x28] sm:$0xff]
    %v730 = vld [vmem:[#allocation8 + $0x30] sm:$0xff]
    %v731 = vld [vmem:[#allocation8 + $0x38] sm:$0xff]
    %v732 = vld [vmem:[#allocation8 + $0x40] sm:$0xff]
    %v733 = vld [vmem:[#allocation8 + $0x48] sm:$0xff]
    %v734 = vld [vmem:[#allocation8 + $0x50] sm:$0xff]
    %v735 = vld [vmem:[#allocation8 + $0x58] sm:$0xff]
    %v736 = vld [vmem:[#allocation8 + $0x60] sm:$0xff]
    %v737 = vld [vmem:[#allocation8 + $0x68] sm:$0xff]
    %v738 = vld [vmem:[#allocation8 + $0x70] sm:$0xff]
    %v739 = vld [vmem:[#allocation8 + $0x78] sm:$0xff]
    %v740 = vld [vmem:[#allocation8 + $0x80] sm:$0xff]
    %v741 = vld [vmem:[#allocation8 + $0x88] sm:$0xff]
    %v742 = vld [vmem:[#allocation8 + $0x90] sm:$0xff]
    %v743 = vld [vmem:[#allocation8 + $0x98] sm:$0xff]
    %v744 = vld [vmem:[#allocation8 + $0xa0] sm:$0xff]
    %v745 = vld [vmem:[#allocation8 + $0xa8] sm:$0xff]
    %v746 = vld [vmem:[#allocation8 + $0xb0] sm:$0xff]
    %v747 = vld [vmem:[#allocation8 + $0xb8] sm:$0xff]
    %v748 = vld [vmem:[#allocation8 + $0xc0] sm:$0xff]
    %v749 = vld [vmem:[#allocation8 + $0xc8] sm:$0xff]
    %v750 = vld [vmem:[#allocation8 + $0xd0] sm:$0xff]
    %v751 = vld [vmem:[#allocation8 + $0xd8] sm:$0xff]
    %v752 = vld [vmem:[#allocation8 + $0xe0] sm:$0xff]
    %v753 = vld [vmem:[#allocation8 + $0xe8] sm:$0xff]
    %v754 = vld [vmem:[#allocation8 + $0xf0] sm:$0xff]
    %v755 = vld [vmem:[#allocation8 + $0xf8] sm:$0xff]
    %s756 = scalar_lea.vmem [#allocation2], 16
    %v757 = vld [vmem:[%s756] sm:$0xff]
    %758 = vmatprep.subr.mxu0 %v725
    %759 = vmatpush1.msra.mxu0 %v724
    %760 = vmatprep.subr.mxu0 %v727
    %761 = vmatpush1.msra.mxu0 %v726
    %762 = vmatprep.subr.mxu0 %v729
    %763 = vmatpush1.msra.mxu0 %v728
    %764 = vmatprep.subr.mxu0 %v731
    %765 = vmatpush1.msra.mxu0 %v730
    %766 = vmatprep.subr.mxu0 %v733
    %767 = vmatpush1.msra.mxu0 %v732
    %768 = vmatprep.subr.mxu0 %v735
    %769 = vmatpush1.msra.mxu0 %v734
    %770 = vmatprep.subr.mxu0 %v737
    %771 = vmatpush1.msra.mxu0 %v736
    %772 = vmatprep.subr.mxu0 %v739
    %773 = vmatpush1.msra.mxu0 %v738
    %774 = vmatprep.subr.mxu0 %v741
    %775 = vmatpush1.msra.mxu0 %v740
    %776 = vmatprep.subr.mxu0 %v743
    %777 = vmatpush1.msra.mxu0 %v742
    %778 = vmatprep.subr.mxu0 %v745
    %779 = vmatpush1.msra.mxu0 %v744
    %780 = vmatprep.subr.mxu0 %v747
    %781 = vmatpush1.msra.mxu0 %v746
    %782 = vmatprep.subr.mxu0 %v749
    %783 = vmatpush1.msra.mxu0 %v748
    %784 = vmatprep.subr.mxu0 %v751
    %785 = vmatpush1.msra.mxu0 %v750
    %786 = vmatprep.subr.mxu0 %v753
    %787 = vmatpush1.msra.mxu0 %v752
    %788 = vmatprep.subr.mxu0 %v755
    %789 = vmatpush1.msra.mxu0 %v754
    %790 = vmatprep.subr.mxu0 0.0
    %791 = vmatpush1.msra.mxu0 0.0
    %792 = vmatprep.subr.mxu0 0.0
    %793 = vmatpush1.msra.mxu0 0.0
    %794 = vmatprep.subr.mxu0 0.0
    %795 = vmatpush1.msra.mxu0 0.0
    %796 = vmatprep.subr.mxu0 0.0
    %797 = vmatpush1.msra.mxu0 0.0
    %798 = vmatprep.subr.mxu0 0.0
    %799 = vmatpush1.msra.mxu0 0.0
    %800 = vmatprep.subr.mxu0 0.0
    %801 = vmatpush1.msra.mxu0 0.0
    %802 = vmatprep.subr.mxu0 0.0
    %803 = vmatpush1.msra.mxu0 0.0
    %804 = vmatprep.subr.mxu0 0.0
    %805 = vmatpush1.msra.mxu0 0.0
    %806 = vmatprep.subr.mxu0 0.0
    %807 = vmatpush1.msra.mxu0 0.0
    %808 = vmatprep.subr.mxu0 0.0
    %809 = vmatpush1.msra.mxu0 0.0
    %810 = vmatprep.subr.mxu0 0.0
    %811 = vmatpush1.msra.mxu0 0.0
    %812 = vmatprep.subr.mxu0 0.0
    %813 = vmatpush1.msra.mxu0 0.0
    %814 = vmatprep.subr.mxu0 0.0
    %815 = vmatpush1.msra.mxu0 0.0
    %816 = vmatprep.subr.mxu0 0.0
    %817 = vmatpush1.msra.mxu0 0.0
    %818 = vmatprep.subr.mxu0 0.0
    %819 = vmatpush1.msra.mxu0 0.0
    %820 = vmatprep.subr.mxu0 0.0
    %821 = vmatpush1.msra.mxu0 0.0
    %822 = vmatprep.mubr.f32.mxu0 0.0
    %823 = vmatmul.mubr.f32.gmra.mrb[0].mxu0 %v606
    %v824 = vpop.f32.mrb[0].mxu0
    %v825 = vadd.f32 0.0, %v824
    %v826 = vpop.f32.mrb[0].mxu0
    %v827 = vadd.f32 0.0, %v826
    %828 = vdwg.mxu0
    %v830 = vsel %vm211, %v757, 0
    %832 = vmatprep.subr.mxu0 %v715
    %833 = vmatpush1.msra.mxu0 %v714
    %834 = vmatprep.subr.mxu0 %v717
    %835 = vmatpush1.msra.mxu0 %v716
    %836 = vmatprep.subr.mxu0 %v719
    %837 = vmatpush1.msra.mxu0 %v718
    %838 = vmatprep.subr.mxu0 %v721
    %839 = vmatpush1.msra.mxu0 %v720
    %840 = vmatprep.subr.mxu0 %v723
    %841 = vmatpush1.msra.mxu0 %v722
    %842 = vmatprep.subr.mxu0 0.0
    %843 = vmatpush1.msra.mxu0 0.0
    %844 = vmatprep.subr.mxu0 0.0
    %845 = vmatpush1.msra.mxu0 0.0
    %846 = vmatprep.subr.mxu0 0.0
    %847 = vmatpush1.msra.mxu0 0.0
    %848 = vmatprep.subr.mxu0 0.0
    %849 = vmatpush1.msra.mxu0 0.0
    %850 = vmatprep.subr.mxu0 0.0
    %851 = vmatpush1.msra.mxu0 0.0
    %852 = vmatprep.subr.mxu0 0.0
    %853 = vmatpush1.msra.mxu0 0.0
    %854 = vmatprep.subr.mxu0 0.0
    %855 = vmatpush1.msra.mxu0 0.0
    %856 = vmatprep.subr.mxu0 0.0
    %857 = vmatpush1.msra.mxu0 0.0
    %858 = vmatprep.subr.mxu0 0.0
    %859 = vmatpush1.msra.mxu0 0.0
    %860 = vmatprep.subr.mxu0 0.0
    %861 = vmatpush1.msra.mxu0 0.0
    %862 = vmatprep.subr.mxu0 0.0
    %863 = vmatpush1.msra.mxu0 0.0
    %864 = vmatprep.subr.mxu0 0.0
    %865 = vmatpush1.msra.mxu0 0.0
    %866 = vmatprep.subr.mxu0 0.0
    %867 = vmatpush1.msra.mxu0 0.0
    %868 = vmatprep.subr.mxu0 0.0
    %869 = vmatpush1.msra.mxu0 0.0
    %870 = vmatprep.subr.mxu0 0.0
    %871 = vmatpush1.msra.mxu0 0.0
    %872 = vmatprep.subr.mxu0 0.0
    %873 = vmatpush1.msra.mxu0 0.0
    %874 = vmatprep.subr.mxu0 0.0
    %875 = vmatpush1.msra.mxu0 0.0
    %876 = vmatprep.subr.mxu0 0.0
    %877 = vmatpush1.msra.mxu0 0.0
    %878 = vmatprep.subr.mxu0 0.0
    %879 = vmatpush1.msra.mxu0 0.0
    %880 = vmatprep.subr.mxu0 0.0
    %881 = vmatpush1.msra.mxu0 0.0
    %882 = vmatprep.subr.mxu0 0.0
    %883 = vmatpush1.msra.mxu0 0.0
    %884 = vmatprep.subr.mxu0 0.0
    %885 = vmatpush1.msra.mxu0 0.0
    %886 = vmatprep.subr.mxu0 0.0
    %887 = vmatpush1.msra.mxu0 0.0
    %888 = vmatprep.subr.mxu0 0.0
    %889 = vmatpush1.msra.mxu0 0.0
    %890 = vmatprep.subr.mxu0 0.0
    %891 = vmatpush1.msra.mxu0 0.0
    %892 = vmatprep.subr.mxu0 0.0
    %893 = vmatpush1.msra.mxu0 0.0
    %894 = vmatprep.subr.mxu0 0.0
    %895 = vmatpush1.msra.mxu0 0.0
    %896 = vmatprep.mubr.f32.mxu0 0.0
    %897 = vmatmul.mubr.f32.gmra.mrb[0].mxu0 %v830
    %v898 = vpop.f32.mrb[0].mxu0
    %v899 = vadd.f32 %v825, %v898
    %v900 = vpop.f32.mrb[0].mxu0
    %v901 = vadd.f32 %v827, %v900
    %902 = vdwg.mxu0
    %v903 = vld [vmem:[%s5] sm:$0x3]
    %v905 = vlaneseq
    %v906 = vshrl.u32 %v905, 7
    %v907 = vsub.s32 0, %v906
    %v908 = vrot.slane %v903, %v907
    %v909 = vlaneseq
    %v910 = vshrl.u32 %v909, 7
    %v911 = vsub.s32 1, %v910
    %v912 = vrot.slane %v903, %v911
    %v915 = vadd.f32 %v899, %v908
    %v916 = vadd.f32 %v901, %v912
    %v917 = vld [vmem:[#allocation10] sm:$0xff]
    %v918 = vld [vmem:[#allocation10 + $0x8] sm:$0xff]
    %v919 = vld [vmem:[#allocation10 + $0x10] sm:$0xff]
    %v920 = vld [vmem:[#allocation10 + $0x18] sm:$0xff]
    %v921 = vld [vmem:[#allocation10 + $0x20] sm:$0xff]
    %v922 = vld [vmem:[#allocation10 + $0x28] sm:$0xff]
    %v923 = vld [vmem:[#allocation10 + $0x30] sm:$0xff]
    %v924 = vld [vmem:[#allocation10 + $0x38] sm:$0xff]
    %v925 = vld [vmem:[#allocation10 + $0x40] sm:$0xff]
    %v926 = vld [vmem:[#allocation10 + $0x48] sm:$0xff]
    %v927 = vld [vmem:[#allocation10 + $0x50] sm:$0xff]
    %v928 = vld [vmem:[#allocation10 + $0x58] sm:$0xff]
    %v929 = vld [vmem:[#allocation10 + $0x60] sm:$0xff]
    %v930 = vld [vmem:[#allocation10 + $0x68] sm:$0xff]
    %v931 = vld [vmem:[#allocation10 + $0x70] sm:$0xff]
    %v932 = vld [vmem:[#allocation10 + $0x78] sm:$0xff]
    %v933 = vld [vmem:[%s6] sm:$0x1]
    %v935 = vlaneseq
    %v936 = vshrl.u32 %v935, 7
    %v937 = vsub.s32 0, %v936
    %v938 = vrot.slane %v933, %v937
    %940 = vmatprep.subr.mxu0 0.0
    %941 = vmatpush1.msra.mxu0 %v917
    %942 = vmatprep.subr.mxu0 0.0
    %943 = vmatpush1.msra.mxu0 %v918
    %944 = vmatprep.subr.mxu0 0.0
    %945 = vmatpush1.msra.mxu0 %v919
    %946 = vmatprep.subr.mxu0 0.0
    %947 = vmatpush1.msra.mxu0 %v920
    %948 = vmatprep.subr.mxu0 0.0
    %949 = vmatpush1.msra.mxu0 %v921
    %950 = vmatprep.subr.mxu0 0.0
    %951 = vmatpush1.msra.mxu0 %v922
    %952 = vmatprep.subr.mxu0 0.0
    %953 = vmatpush1.msra.mxu0 %v923
    %954 = vmatprep.subr.mxu0 0.0
    %955 = vmatpush1.msra.mxu0 %v924
    %956 = vmatprep.subr.mxu0 0.0
    %957 = vmatpush1.msra.mxu0 %v925
    %958 = vmatprep.subr.mxu0 0.0
    %959 = vmatpush1.msra.mxu0 %v926
    %960 = vmatprep.subr.mxu0 0.0
    %961 = vmatpush1.msra.mxu0 %v927
    %962 = vmatprep.subr.mxu0 0.0
    %963 = vmatpush1.msra.mxu0 %v928
    %964 = vmatprep.subr.mxu0 0.0
    %965 = vmatpush1.msra.mxu0 %v929
    %966 = vmatprep.subr.mxu0 0.0
    %967 = vmatpush1.msra.mxu0 %v930
    %968 = vmatprep.subr.mxu0 0.0
    %969 = vmatpush1.msra.mxu0 %v931
    %970 = vmatprep.subr.mxu0 0.0
    %971 = vmatpush1.msra.mxu0 %v932
    %972 = vmatprep.subr.mxu0 0.0
    %973 = vmatpush1.msra.mxu0 0.0
    %974 = vmatprep.subr.mxu0 0.0
    %975 = vmatpush1.msra.mxu0 0.0
    %976 = vmatprep.subr.mxu0 0.0
    %977 = vmatpush1.msra.mxu0 0.0
    %978 = vmatprep.subr.mxu0 0.0
    %979 = vmatpush1.msra.mxu0 0.0
    %980 = vmatprep.subr.mxu0 0.0
    %981 = vmatpush1.msra.mxu0 0.0
    %982 = vmatprep.subr.mxu0 0.0
    %983 = vmatpush1.msra.mxu0 0.0
    %984 = vmatprep.subr.mxu0 0.0
    %985 = vmatpush1.msra.mxu0 0.0
    %986 = vmatprep.subr.mxu0 0.0
    %987 = vmatpush1.msra.mxu0 0.0
    %988 = vmatprep.subr.mxu0 0.0
    %989 = vmatpush1.msra.mxu0 0.0
    %990 = vmatprep.subr.mxu0 0.0
    %991 = vmatpush1.msra.mxu0 0.0
    %992 = vmatprep.subr.mxu0 0.0
    %993 = vmatpush1.msra.mxu0 0.0
    %994 = vmatprep.subr.mxu0 0.0
    %995 = vmatpush1.msra.mxu0 0.0
    %996 = vmatprep.subr.mxu0 0.0
    %997 = vmatpush1.msra.mxu0 0.0
    %998 = vmatprep.subr.mxu0 0.0
    %999 = vmatpush1.msra.mxu0 0.0
    %1000 = vmatprep.subr.mxu0 0.0
    %1001 = vmatpush1.msra.mxu0 0.0
    %1002 = vmatprep.subr.mxu0 0.0
    %1003 = vmatpush1.msra.mxu0 0.0
    %1004 = vmatprep.mubr.f32.mxu0 0.0
    %1005 = vmatmul.mubr.f32.gmra.mrb[0].mxu0 %v916
    %v1006 = vpop.f32.mrb[0].mxu0
    %v1007 = vadd.f32 %v938, %v1006
    %v1008 = vpop.f32.mrb[0].mxu0
    %1009 = vdwg.mxu0
    %1010 = vmax.xlane.f32.xlu0 %v1007
    %v1011 = vpop.xlane.xlu0 %1010
    %v1012 = vsub.f32 %v1007, %v1011
    %v1013 = vmul.f32 %v1012, 1.442695
    %v1014 = vpow.pop %v1013
    %1015 = vadd.xlane.f32.xlu0 %v1014
    %v1016 = vpop.xlane.xlu0 %1015
    %v1017 = vlog2.pop %v1016
    %v1018 = vmul.f32 %v1017, 0.6931472
    %v1019 = vadd.f32 %v1011, %v1018
    %v1020 = vsub.f32 %v1007, %v1019
    %s1021 = scalar_lea.vmem [#allocation11], 16
    %1022 = vst [vmem:[%s1021] sm:$0xff] %v1020
    %v1023 = vld [vmem:[#allocation7] sm:$0xff]
    %v1024 = vld [vmem:[#allocation7 + $0x8] sm:$0xff]
    %v1025 = vld [vmem:[#allocation7 + $0x10] sm:$0xff]
    %v1026 = vld [vmem:[#allocation7 + $0x18] sm:$0xff]
    %v1027 = vld [vmem:[#allocation7 + $0x20] sm:$0xff]
    %v1028 = vld [vmem:[#allocation7 + $0x28] sm:$0xff]
    %v1029 = vld [vmem:[#allocation7 + $0x30] sm:$0xff]
    %v1030 = vld [vmem:[#allocation7 + $0x38] sm:$0xff]
    %v1031 = vld [vmem:[#allocation7 + $0x40] sm:$0xff]
    %v1032 = vld [vmem:[#allocation7 + $0x48] sm:$0xff]
    %v1033 = vld [vmem:[#allocation8] sm:$0xff]
    %v1034 = vld [vmem:[#allocation8 + $0x8] sm:$0xff]
    %v1035 = vld [vmem:[#allocation8 + $0x10] sm:$0xff]
    %v1036 = vld [vmem:[#allocation8 + $0x18] sm:$0xff]
    %v1037 = vld [vmem:[#allocation8 + $0x20] sm:$0xff]
    %v1038 = vld [vmem:[#allocation8 + $0x28] sm:$0xff]
    %v1039 = vld [vmem:[#allocation8 + $0x30] sm:$0xff]
    %v1040 = vld [vmem:[#allocation8 + $0x38] sm:$0xff]
    %v1041 = vld [vmem:[#allocation8 + $0x40] sm:$0xff]
    %v1042 = vld [vmem:[#allocation8 + $0x48] sm:$0xff]
    %v1043 = vld [vmem:[#allocation8 + $0x50] sm:$0xff]
    %v1044 = vld [vmem:[#allocation8 + $0x58] sm:$0xff]
    %v1045 = vld [vmem:[#allocation8 + $0x60] sm:$0xff]
    %v1046 = vld [vmem:[#allocation8 + $0x68] sm:$0xff]
    %v1047 = vld [vmem:[#allocation8 + $0x70] sm:$0xff]
    %v1048 = vld [vmem:[#allocation8 + $0x78] sm:$0xff]
    %v1049 = vld [vmem:[#allocation8 + $0x80] sm:$0xff]
    %v1050 = vld [vmem:[#allocation8 + $0x88] sm:$0xff]
    %v1051 = vld [vmem:[#allocation8 + $0x90] sm:$0xff]
    %v1052 = vld [vmem:[#allocation8 + $0x98] sm:$0xff]
    %v1053 = vld [vmem:[#allocation8 + $0xa0] sm:$0xff]
    %v1054 = vld [vmem:[#allocation8 + $0xa8] sm:$0xff]
    %v1055 = vld [vmem:[#allocation8 + $0xb0] sm:$0xff]
    %v1056 = vld [vmem:[#allocation8 + $0xb8] sm:$0xff]
    %v1057 = vld [vmem:[#allocation8 + $0xc0] sm:$0xff]
    %v1058 = vld [vmem:[#allocation8 + $0xc8] sm:$0xff]
    %v1059 = vld [vmem:[#allocation8 + $0xd0] sm:$0xff]
    %v1060 = vld [vmem:[#allocation8 + $0xd8] sm:$0xff]
    %v1061 = vld [vmem:[#allocation8 + $0xe0] sm:$0xff]
    %v1062 = vld [vmem:[#allocation8 + $0xe8] sm:$0xff]
    %v1063 = vld [vmem:[#allocation8 + $0xf0] sm:$0xff]
    %v1064 = vld [vmem:[#allocation8 + $0xf8] sm:$0xff]
    %s1065 = scalar_lea.vmem [#allocation2], 24
    %v1066 = vld [vmem:[%s1065] sm:$0xff]
    %1067 = vmatprep.subr.mxu0 %v1034
    %1068 = vmatpush1.msra.mxu0 %v1033
    %1069 = vmatprep.subr.mxu0 %v1036
    %1070 = vmatpush1.msra.mxu0 %v1035
    %1071 = vmatprep.subr.mxu0 %v1038
    %1072 = vmatpush1.msra.mxu0 %v1037
    %1073 = vmatprep.subr.mxu0 %v1040
    %1074 = vmatpush1.msra.mxu0 %v1039
    %1075 = vmatprep.subr.mxu0 %v1042
    %1076 = vmatpush1.msra.mxu0 %v1041
    %1077 = vmatprep.subr.mxu0 %v1044
    %1078 = vmatpush1.msra.mxu0 %v1043
    %1079 = vmatprep.subr.mxu0 %v1046
    %1080 = vmatpush1.msra.mxu0 %v1045
    %1081 = vmatprep.subr.mxu0 %v1048
    %1082 = vmatpush1.msra.mxu0 %v1047
    %1083 = vmatprep.subr.mxu0 %v1050
    %1084 = vmatpush1.msra.mxu0 %v1049
    %1085 = vmatprep.subr.mxu0 %v1052
    %1086 = vmatpush1.msra.mxu0 %v1051
    %1087 = vmatprep.subr.mxu0 %v1054
    %1088 = vmatpush1.msra.mxu0 %v1053
    %1089 = vmatprep.subr.mxu0 %v1056
    %1090 = vmatpush1.msra.mxu0 %v1055
    %1091 = vmatprep.subr.mxu0 %v1058
    %1092 = vmatpush1.msra.mxu0 %v1057
    %1093 = vmatprep.subr.mxu0 %v1060
    %1094 = vmatpush1.msra.mxu0 %v1059
    %1095 = vmatprep.subr.mxu0 %v1062
    %1096 = vmatpush1.msra.mxu0 %v1061
    %1097 = vmatprep.subr.mxu0 %v1064
    %1098 = vmatpush1.msra.mxu0 %v1063
    %1099 = vmatprep.subr.mxu0 0.0
    %1100 = vmatpush1.msra.mxu0 0.0
    %1101 = vmatprep.subr.mxu0 0.0
    %1102 = vmatpush1.msra.mxu0 0.0
    %1103 = vmatprep.subr.mxu0 0.0
    %1104 = vmatpush1.msra.mxu0 0.0
    %1105 = vmatprep.subr.mxu0 0.0
    %1106 = vmatpush1.msra.mxu0 0.0
    %1107 = vmatprep.subr.mxu0 0.0
    %1108 = vmatpush1.msra.mxu0 0.0
    %1109 = vmatprep.subr.mxu0 0.0
    %1110 = vmatpush1.msra.mxu0 0.0
    %1111 = vmatprep.subr.mxu0 0.0
    %1112 = vmatpush1.msra.mxu0 0.0
    %1113 = vmatprep.subr.mxu0 0.0
    %1114 = vmatpush1.msra.mxu0 0.0
    %1115 = vmatprep.subr.mxu0 0.0
    %1116 = vmatpush1.msra.mxu0 0.0
    %1117 = vmatprep.subr.mxu0 0.0
    %1118 = vmatpush1.msra.mxu0 0.0
    %1119 = vmatprep.subr.mxu0 0.0
    %1120 = vmatpush1.msra.mxu0 0.0
    %1121 = vmatprep.subr.mxu0 0.0
    %1122 = vmatpush1.msra.mxu0 0.0
    %1123 = vmatprep.subr.mxu0 0.0
    %1124 = vmatpush1.msra.mxu0 0.0
    %1125 = vmatprep.subr.mxu0 0.0
    %1126 = vmatpush1.msra.mxu0 0.0
    %1127 = vmatprep.subr.mxu0 0.0
    %1128 = vmatpush1.msra.mxu0 0.0
    %1129 = vmatprep.subr.mxu0 0.0
    %1130 = vmatpush1.msra.mxu0 0.0
    %1131 = vmatprep.mubr.f32.mxu0 0.0
    %1132 = vmatmul.mubr.f32.gmra.mrb[0].mxu0 %v915
    %v1133 = vpop.f32.mrb[0].mxu0
    %v1134 = vadd.f32 0.0, %v1133
    %v1135 = vpop.f32.mrb[0].mxu0
    %v1136 = vadd.f32 0.0, %v1135
    %1137 = vdwg.mxu0
    %v1139 = vsel %vm211, %v1066, 0
    %1141 = vmatprep.subr.mxu0 %v1024
    %1142 = vmatpush1.msra.mxu0 %v1023
    %1143 = vmatprep.subr.mxu0 %v1026
    %1144 = vmatpush1.msra.mxu0 %v1025
    %1145 = vmatprep.subr.mxu0 %v1028
    %1146 = vmatpush1.msra.mxu0 %v1027
    %1147 = vmatprep.subr.mxu0 %v1030
    %1148 = vmatpush1.msra.mxu0 %v1029
    %1149 = vmatprep.subr.mxu0 %v1032
    %1150 = vmatpush1.msra.mxu0 %v1031
    %1151 = vmatprep.subr.mxu0 0.0
    %1152 = vmatpush1.msra.mxu0 0.0
    %1153 = vmatprep.subr.mxu0 0.0
    %1154 = vmatpush1.msra.mxu0 0.0
    %1155 = vmatprep.subr.mxu0 0.0
    %1156 = vmatpush1.msra.mxu0 0.0
    %1157 = vmatprep.subr.mxu0 0.0
    %1158 = vmatpush1.msra.mxu0 0.0
    %1159 = vmatprep.subr.mxu0 0.0
    %1160 = vmatpush1.msra.mxu0 0.0
    %1161 = vmatprep.subr.mxu0 0.0
    %1162 = vmatpush1.msra.mxu0 0.0
    %1163 = vmatprep.subr.mxu0 0.0
    %1164 = vmatpush1.msra.mxu0 0.0
    %1165 = vmatprep.subr.mxu0 0.0
    %1166 = vmatpush1.msra.mxu0 0.0
    %1167 = vmatprep.subr.mxu0 0.0
    %1168 = vmatpush1.msra.mxu0 0.0
    %1169 = vmatprep.subr.mxu0 0.0
    %1170 = vmatpush1.msra.mxu0 0.0
    %1171 = vmatprep.subr.mxu0 0.0
    %1172 = vmatpush1.msra.mxu0 0.0
    %1173 = vmatprep.subr.mxu0 0.0
    %1174 = vmatpush1.msra.mxu0 0.0
    %1175 = vmatprep.subr.mxu0 0.0
    %1176 = vmatpush1.msra.mxu0 0.0
    %1177 = vmatprep.subr.mxu0 0.0
    %1178 = vmatpush1.msra.mxu0 0.0
    %1179 = vmatprep.subr.mxu0 0.0
    %1180 = vmatpush1.msra.mxu0 0.0
    %1181 = vmatprep.subr.mxu0 0.0
    %1182 = vmatpush1.msra.mxu0 0.0
    %1183 = vmatprep.subr.mxu0 0.0
    %1184 = vmatpush1.msra.mxu0 0.0
    %1185 = vmatprep.subr.mxu0 0.0
    %1186 = vmatpush1.msra.mxu0 0.0
    %1187 = vmatprep.subr.mxu0 0.0
    %1188 = vmatpush1.msra.mxu0 0.0
    %1189 = vmatprep.subr.mxu0 0.0
    %1190 = vmatpush1.msra.mxu0 0.0
    %1191 = vmatprep.subr.mxu0 0.0
    %1192 = vmatpush1.msra.mxu0 0.0
    %1193 = vmatprep.subr.mxu0 0.0
    %1194 = vmatpush1.msra.mxu0 0.0
    %1195 = vmatprep.subr.mxu0 0.0
    %1196 = vmatpush1.msra.mxu0 0.0
    %1197 = vmatprep.subr.mxu0 0.0
    %1198 = vmatpush1.msra.mxu0 0.0
    %1199 = vmatprep.subr.mxu0 0.0
    %1200 = vmatpush1.msra.mxu0 0.0
    %1201 = vmatprep.subr.mxu0 0.0
    %1202 = vmatpush1.msra.mxu0 0.0
    %1203 = vmatprep.subr.mxu0 0.0
    %1204 = vmatpush1.msra.mxu0 0.0
    %1205 = vmatprep.mubr.f32.mxu0 0.0
    %1206 = vmatmul.mubr.f32.gmra.mrb[0].mxu0 %v1139
    %v1207 = vpop.f32.mrb[0].mxu0
    %v1208 = vadd.f32 %v1134, %v1207
    %v1209 = vpop.f32.mrb[0].mxu0
    %v1210 = vadd.f32 %v1136, %v1209
    %1211 = vdwg.mxu0
    %v1212 = vld [vmem:[%s5] sm:$0x3]
    %v1214 = vlaneseq
    %v1215 = vshrl.u32 %v1214, 7
    %v1216 = vsub.s32 0, %v1215
    %v1217 = vrot.slane %v1212, %v1216
    %v1218 = vlaneseq
    %v1219 = vshrl.u32 %v1218, 7
    %v1220 = vsub.s32 1, %v1219
    %v1221 = vrot.slane %v1212, %v1220
    %v1224 = vadd.f32 %v1208, %v1217
    %v1225 = vadd.f32 %v1210, %v1221
    %v1226 = vld [vmem:[#allocation10] sm:$0xff]
    %v1227 = vld [vmem:[#allocation10 + $0x8] sm:$0xff]
    %v1228 = vld [vmem:[#allocation10 + $0x10] sm:$0xff]
    %v1229 = vld [vmem:[#allocation10 + $0x18] sm:$0xff]
    %v1230 = vld [vmem:[#allocation10 + $0x20] sm:$0xff]
    %v1231 = vld [vmem:[#allocation10 + $0x28] sm:$0xff]
    %v1232 = vld [vmem:[#allocation10 + $0x30] sm:$0xff]
    %v1233 = vld [vmem:[#allocation10 + $0x38] sm:$0xff]
    %v1234 = vld [vmem:[#allocation10 + $0x40] sm:$0xff]
    %v1235 = vld [vmem:[#allocation10 + $0x48] sm:$0xff]
    %v1236 = vld [vmem:[#allocation10 + $0x50] sm:$0xff]
    %v1237 = vld [vmem:[#allocation10 + $0x58] sm:$0xff]
    %v1238 = vld [vmem:[#allocation10 + $0x60] sm:$0xff]
    %v1239 = vld [vmem:[#allocation10 + $0x68] sm:$0xff]
    %v1240 = vld [vmem:[#allocation10 + $0x70] sm:$0xff]
    %v1241 = vld [vmem:[#allocation10 + $0x78] sm:$0xff]
    %v1242 = vld [vmem:[%s6] sm:$0x1]
    %v1244 = vlaneseq
    %v1245 = vshrl.u32 %v1244, 7
    %v1246 = vsub.s32 0, %v1245
    %v1247 = vrot.slane %v1242, %v1246
    %1249 = vmatprep.subr.mxu0 0.0
    %1250 = vmatpush1.msra.mxu0 %v1226
    %1251 = vmatprep.subr.mxu0 0.0
    %1252 = vmatpush1.msra.mxu0 %v1227
    %1253 = vmatprep.subr.mxu0 0.0
    %1254 = vmatpush1.msra.mxu0 %v1228
    %1255 = vmatprep.subr.mxu0 0.0
    %1256 = vmatpush1.msra.mxu0 %v1229
    %1257 = vmatprep.subr.mxu0 0.0
    %1258 = vmatpush1.msra.mxu0 %v1230
    %1259 = vmatprep.subr.mxu0 0.0
    %1260 = vmatpush1.msra.mxu0 %v1231
    %1261 = vmatprep.subr.mxu0 0.0
    %1262 = vmatpush1.msra.mxu0 %v1232
    %1263 = vmatprep.subr.mxu0 0.0
    %1264 = vmatpush1.msra.mxu0 %v1233
    %1265 = vmatprep.subr.mxu0 0.0
    %1266 = vmatpush1.msra.mxu0 %v1234
    %1267 = vmatprep.subr.mxu0 0.0
    %1268 = vmatpush1.msra.mxu0 %v1235
    %1269 = vmatprep.subr.mxu0 0.0
    %1270 = vmatpush1.msra.mxu0 %v1236
    %1271 = vmatprep.subr.mxu0 0.0
    %1272 = vmatpush1.msra.mxu0 %v1237
    %1273 = vmatprep.subr.mxu0 0.0
    %1274 = vmatpush1.msra.mxu0 %v1238
    %1275 = vmatprep.subr.mxu0 0.0
    %1276 = vmatpush1.msra.mxu0 %v1239
    %1277 = vmatprep.subr.mxu0 0.0
    %1278 = vmatpush1.msra.mxu0 %v1240
    %1279 = vmatprep.subr.mxu0 0.0
    %1280 = vmatpush1.msra.mxu0 %v1241
    %1281 = vmatprep.subr.mxu0 0.0
    %1282 = vmatpush1.msra.mxu0 0.0
    %1283 = vmatprep.subr.mxu0 0.0
    %1284 = vmatpush1.msra.mxu0 0.0
    %1285 = vmatprep.subr.mxu0 0.0
    %1286 = vmatpush1.msra.mxu0 0.0
    %1287 = vmatprep.subr.mxu0 0.0
    %1288 = vmatpush1.msra.mxu0 0.0
    %1289 = vmatprep.subr.mxu0 0.0
    %1290 = vmatpush1.msra.mxu0 0.0
    %1291 = vmatprep.subr.mxu0 0.0
    %1292 = vmatpush1.msra.mxu0 0.0
    %1293 = vmatprep.subr.mxu0 0.0
    %1294 = vmatpush1.msra.mxu0 0.0
    %1295 = vmatprep.subr.mxu0 0.0
    %1296 = vmatpush1.msra.mxu0 0.0
    %1297 = vmatprep.subr.mxu0 0.0
    %1298 = vmatpush1.msra.mxu0 0.0
    %1299 = vmatprep.subr.mxu0 0.0
    %1300 = vmatpush1.msra.mxu0 0.0
    %1301 = vmatprep.subr.mxu0 0.0
    %1302 = vmatpush1.msra.mxu0 0.0
    %1303 = vmatprep.subr.mxu0 0.0
    %1304 = vmatpush1.msra.mxu0 0.0
    %1305 = vmatprep.subr.mxu0 0.0
    %1306 = vmatpush1.msra.mxu0 0.0
    %1307 = vmatprep.subr.mxu0 0.0
    %1308 = vmatpush1.msra.mxu0 0.0
    %1309 = vmatprep.subr.mxu0 0.0
    %1310 = vmatpush1.msra.mxu0 0.0
    %1311 = vmatprep.subr.mxu0 0.0
    %1312 = vmatpush1.msra.mxu0 0.0
    %1313 = vmatprep.mubr.f32.mxu0 0.0
    %1314 = vmatmul.mubr.f32.gmra.mrb[0].mxu0 %v1225
    %v1315 = vpop.f32.mrb[0].mxu0
    %v1316 = vadd.f32 %v1247, %v1315
    %v1317 = vpop.f32.mrb[0].mxu0
    %1318 = vdwg.mxu0
    %1319 = vmax.xlane.f32.xlu0 %v1316
    %v1320 = vpop.xlane.xlu0 %1319
    %v1321 = vsub.f32 %v1316, %v1320
    %v1322 = vmul.f32 %v1321, 1.442695
    %v1323 = vpow.pop %v1322
    %1324 = vadd.xlane.f32.xlu0 %v1323
    %v1325 = vpop.xlane.xlu0 %1324
    %v1326 = vlog2.pop %v1325
    %v1327 = vmul.f32 %v1326, 0.6931472
    %v1328 = vadd.f32 %v1320, %v1327
    %v1329 = vsub.f32 %v1316, %v1328
    %s1330 = scalar_lea.vmem [#allocation11], 24
    %1331 = vst [vmem:[%s1330] sm:$0xff] %v1329
    %v1332 = vld [vmem:[#allocation7] sm:$0xff]
    %v1333 = vld [vmem:[#allocation7 + $0x8] sm:$0xff]
    %v1334 = vld [vmem:[#allocation7 + $0x10] sm:$0xff]
    %v1335 = vld [vmem:[#allocation7 + $0x18] sm:$0xff]
    %v1336 = vld [vmem:[#allocation7 + $0x20] sm:$0xff]
    %v1337 = vld [vmem:[#allocation7 + $0x28] sm:$0xff]
    %v1338 = vld [vmem:[#allocation7 + $0x30] sm:$0xff]
    %v1339 = vld [vmem:[#allocation7 + $0x38] sm:$0xff]
    %v1340 = vld [vmem:[#allocation7 + $0x40] sm:$0xff]
    %v1341 = vld [vmem:[#allocation7 + $0x48] sm:$0xff]
    %v1342 = vld [vmem:[#allocation8] sm:$0xff]
    %v1343 = vld [vmem:[#allocation8 + $0x8] sm:$0xff]
    %v1344 = vld [vmem:[#allocation8 + $0x10] sm:$0xff]
    %v1345 = vld [vmem:[#allocation8 + $0x18] sm:$0xff]
    %v1346 = vld [vmem:[#allocation8 + $0x20] sm:$0xff]
    %v1347 = vld [vmem:[#allocation8 + $0x28] sm:$0xff]
    %v1348 = vld [vmem:[#allocation8 + $0x30] sm:$0xff]
    %v1349 = vld [vmem:[#allocation8 + $0x38] sm:$0xff]
    %v1350 = vld [vmem:[#allocation8 + $0x40] sm:$0xff]
    %v1351 = vld [vmem:[#allocation8 + $0x48] sm:$0xff]
    %v1352 = vld [vmem:[#allocation8 + $0x50] sm:$0xff]
    %v1353 = vld [vmem:[#allocation8 + $0x58] sm:$0xff]
    %v1354 = vld [vmem:[#allocation8 + $0x60] sm:$0xff]
    %v1355 = vld [vmem:[#allocation8 + $0x68] sm:$0xff]
    %v1356 = vld [vmem:[#allocation8 + $0x70] sm:$0xff]
    %v1357 = vld [vmem:[#allocation8 + $0x78] sm:$0xff]
    %v1358 = vld [vmem:[#allocation8 + $0x80] sm:$0xff]
    %v1359 = vld [vmem:[#allocation8 + $0x88] sm:$0xff]
    %v1360 = vld [vmem:[#allocation8 + $0x90] sm:$0xff]
    %v1361 = vld [vmem:[#allocation8 + $0x98] sm:$0xff]
    %v1362 = vld [vmem:[#allocation8 + $0xa0] sm:$0xff]
    %v1363 = vld [vmem:[#allocation8 + $0xa8] sm:$0xff]
    %v1364 = vld [vmem:[#allocation8 + $0xb0] sm:$0xff]
    %v1365 = vld [vmem:[#allocation8 + $0xb8] sm:$0xff]
    %v1366 = vld [vmem:[#allocation8 + $0xc0] sm:$0xff]
    %v1367 = vld [vmem:[#allocation8 + $0xc8] sm:$0xff]
    %v1368 = vld [vmem:[#allocation8 + $0xd0] sm:$0xff]
    %v1369 = vld [vmem:[#allocation8 + $0xd8] sm:$0xff]
    %v1370 = vld [vmem:[#allocation8 + $0xe0] sm:$0xff]
    %v1371 = vld [vmem:[#allocation8 + $0xe8] sm:$0xff]
    %v1372 = vld [vmem:[#allocation8 + $0xf0] sm:$0xff]
    %v1373 = vld [vmem:[#allocation8 + $0xf8] sm:$0xff]
    %s1374 = scalar_lea.vmem [#allocation2], 32
    %v1375 = vld [vmem:[%s1374] sm:$0xff]
    %1376 = vmatprep.subr.mxu0 %v1343
    %1377 = vmatpush1.msra.mxu0 %v1342
    %1378 = vmatprep.subr.mxu0 %v1345
    %1379 = vmatpush1.msra.mxu0 %v1344
    %1380 = vmatprep.subr.mxu0 %v1347
    %1381 = vmatpush1.msra.mxu0 %v1346
    %1382 = vmatprep.subr.mxu0 %v1349
    %1383 = vmatpush1.msra.mxu0 %v1348
    %1384 = vmatprep.subr.mxu0 %v1351
    %1385 = vmatpush1.msra.mxu0 %v1350
    %1386 = vmatprep.subr.mxu0 %v1353
    %1387 = vmatpush1.msra.mxu0 %v1352
    %1388 = vmatprep.subr.mxu0 %v1355
    %1389 = vmatpush1.msra.mxu0 %v1354
    %1390 = vmatprep.subr.mxu0 %v1357
    %1391 = vmatpush1.msra.mxu0 %v1356
    %1392 = vmatprep.subr.mxu0 %v1359
    %1393 = vmatpush1.msra.mxu0 %v1358
    %1394 = vmatprep.subr.mxu0 %v1361
    %1395 = vmatpush1.msra.mxu0 %v1360
    %1396 = vmatprep.subr.mxu0 %v1363
    %1397 = vmatpush1.msra.mxu0 %v1362
    %1398 = vmatprep.subr.mxu0 %v1365
    %1399 = vmatpush1.msra.mxu0 %v1364
    %1400 = vmatprep.subr.mxu0 %v1367
    %1401 = vmatpush1.msra.mxu0 %v1366
    %1402 = vmatprep.subr.mxu0 %v1369
    %1403 = vmatpush1.msra.mxu0 %v1368
    %1404 = vmatprep.subr.mxu0 %v1371
    %1405 = vmatpush1.msra.mxu0 %v1370
    %1406 = vmatprep.subr.mxu0 %v1373
    %1407 = vmatpush1.msra.mxu0 %v1372
    %1408 = vmatprep.subr.mxu0 0.0
    %1409 = vmatpush1.msra.mxu0 0.0
    %1410 = vmatprep.subr.mxu0 0.0
    %1411 = vmatpush1.msra.mxu0 0.0
    %1412 = vmatprep.subr.mxu0 0.0
    %1413 = vmatpush1.msra.mxu0 0.0
    %1414 = vmatprep.subr.mxu0 0.0
    %1415 = vmatpush1.msra.mxu0 0.0
    %1416 = vmatprep.subr.mxu0 0.0
    %1417 = vmatpush1.msra.mxu0 0.0
    %1418 = vmatprep.subr.mxu0 0.0
    %1419 = vmatpush1.msra.mxu0 0.0
    %1420 = vmatprep.subr.mxu0 0.0
    %1421 = vmatpush1.msra.mxu0 0.0
    %1422 = vmatprep.subr.mxu0 0.0
    %1423 = vmatpush1.msra.mxu0 0.0
    %1424 = vmatprep.subr.mxu0 0.0
    %1425 = vmatpush1.msra.mxu0 0.0
    %1426 = vmatprep.subr.mxu0 0.0
    %1427 = vmatpush1.msra.mxu0 0.0
    %1428 = vmatprep.subr.mxu0 0.0
    %1429 = vmatpush1.msra.mxu0 0.0
    %1430 = vmatprep.subr.mxu0 0.0
    %1431 = vmatpush1.msra.mxu0 0.0
    %1432 = vmatprep.subr.mxu0 0.0
    %1433 = vmatpush1.msra.mxu0 0.0
    %1434 = vmatprep.subr.mxu0 0.0
    %1435 = vmatpush1.msra.mxu0 0.0
    %1436 = vmatprep.subr.mxu0 0.0
    %1437 = vmatpush1.msra.mxu0 0.0
    %1438 = vmatprep.subr.mxu0 0.0
    %1439 = vmatpush1.msra.mxu0 0.0
    %1440 = vmatprep.mubr.f32.mxu0 0.0
    %1441 = vmatmul.mubr.f32.gmra.mrb[0].mxu0 %v1224
    %v1442 = vpop.f32.mrb[0].mxu0
    %v1443 = vadd.f32 0.0, %v1442
    %v1444 = vpop.f32.mrb[0].mxu0
    %v1445 = vadd.f32 0.0, %v1444
    %1446 = vdwg.mxu0
    %v1448 = vsel %vm211, %v1375, 0
    %1450 = vmatprep.subr.mxu0 %v1333
    %1451 = vmatpush1.msra.mxu0 %v1332
    %1452 = vmatprep.subr.mxu0 %v1335
    %1453 = vmatpush1.msra.mxu0 %v1334
    %1454 = vmatprep.subr.mxu0 %v1337
    %1455 = vmatpush1.msra.mxu0 %v1336
    %1456 = vmatprep.subr.mxu0 %v1339
    %1457 = vmatpush1.msra.mxu0 %v1338
    %1458 = vmatprep.subr.mxu0 %v1341
    %1459 = vmatpush1.msra.mxu0 %v1340
    %1460 = vmatprep.subr.mxu0 0.0
    %1461 = vmatpush1.msra.mxu0 0.0
    %1462 = vmatprep.subr.mxu0 0.0
    %1463 = vmatpush1.msra.mxu0 0.0
    %1464 = vmatprep.subr.mxu0 0.0
    %1465 = vmatpush1.msra.mxu0 0.0
    %1466 = vmatprep.subr.mxu0 0.0
    %1467 = vmatpush1.msra.mxu0 0.0
    %1468 = vmatprep.subr.mxu0 0.0
    %1469 = vmatpush1.msra.mxu0 0.0
    %1470 = vmatprep.subr.mxu0 0.0
    %1471 = vmatpush1.msra.mxu0 0.0
    %1472 = vmatprep.subr.mxu0 0.0
    %1473 = vmatpush1.msra.mxu0 0.0
    %1474 = vmatprep.subr.mxu0 0.0
    %1475 = vmatpush1.msra.mxu0 0.0
    %1476 = vmatprep.subr.mxu0 0.0
    %1477 = vmatpush1.msra.mxu0 0.0
    %1478 = vmatprep.subr.mxu0 0.0
    %1479 = vmatpush1.msra.mxu0 0.0
    %1480 = vmatprep.subr.mxu0 0.0
    %1481 = vmatpush1.msra.mxu0 0.0
    %1482 = vmatprep.subr.mxu0 0.0
    %1483 = vmatpush1.msra.mxu0 0.0
    %1484 = vmatprep.subr.mxu0 0.0
    %1485 = vmatpush1.msra.mxu0 0.0
    %1486 = vmatprep.subr.mxu0 0.0
    %1487 = vmatpush1.msra.mxu0 0.0
    %1488 = vmatprep.subr.mxu0 0.0
    %1489 = vmatpush1.msra.mxu0 0.0
    %1490 = vmatprep.subr.mxu0 0.0
    %1491 = vmatpush1.msra.mxu0 0.0
    %1492 = vmatprep.subr.mxu0 0.0
    %1493 = vmatpush1.msra.mxu0 0.0
    %1494 = vmatprep.subr.mxu0 0.0
    %1495 = vmatpush1.msra.mxu0 0.0
    %1496 = vmatprep.subr.mxu0 0.0
    %1497 = vmatpush1.msra.mxu0 0.0
    %1498 = vmatprep.subr.mxu0 0.0
    %1499 = vmatpush1.msra.mxu0 0.0
    %1500 = vmatprep.subr.mxu0 0.0
    %1501 = vmatpush1.msra.mxu0 0.0
    %1502 = vmatprep.subr.mxu0 0.0
    %1503 = vmatpush1.msra.mxu0 0.0
    %1504 = vmatprep.subr.mxu0 0.0
    %1505 = vmatpush1.msra.mxu0 0.0
    %1506 = vmatprep.subr.mxu0 0.0
    %1507 = vmatpush1.msra.mxu0 0.0
    %1508 = vmatprep.subr.mxu0 0.0
    %1509 = vmatpush1.msra.mxu0 0.0
    %1510 = vmatprep.subr.mxu0 0.0
    %1511 = vmatpush1.msra.mxu0 0.0
    %1512 = vmatprep.subr.mxu0 0.0
    %1513 = vmatpush1.msra.mxu0 0.0
    %1514 = vmatprep.mubr.f32.mxu0 0.0
    %1515 = vmatmul.mubr.f32.gmra.mrb[0].mxu0 %v1448
    %v1516 = vpop.f32.mrb[0].mxu0
    %v1517 = vadd.f32 %v1443, %v1516
    %v1518 = vpop.f32.mrb[0].mxu0
    %v1519 = vadd.f32 %v1445, %v1518
    %1520 = vdwg.mxu0
    %v1521 = vld [vmem:[%s5] sm:$0x3]
    %v1523 = vlaneseq
    %v1524 = vshrl.u32 %v1523, 7
    %v1525 = vsub.s32 0, %v1524
    %v1526 = vrot.slane %v1521, %v1525
    %v1527 = vlaneseq
    %v1528 = vshrl.u32 %v1527, 7
    %v1529 = vsub.s32 1, %v1528
    %v1530 = vrot.slane %v1521, %v1529
    %v1533 = vadd.f32 %v1517, %v1526
    %v1534 = vadd.f32 %v1519, %v1530
    %v1535 = vld [vmem:[#allocation10] sm:$0xff]
    %v1536 = vld [vmem:[#allocation10 + $0x8] sm:$0xff]
    %v1537 = vld [vmem:[#allocation10 + $0x10] sm:$0xff]
    %v1538 = vld [vmem:[#allocation10 + $0x18] sm:$0xff]
    %v1539 = vld [vmem:[#allocation10 + $0x20] sm:$0xff]
    %v1540 = vld [vmem:[#allocation10 + $0x28] sm:$0xff]
    %v1541 = vld [vmem:[#allocation10 + $0x30] sm:$0xff]
    %v1542 = vld [vmem:[#allocation10 + $0x38] sm:$0xff]
    %v1543 = vld [vmem:[#allocation10 + $0x40] sm:$0xff]
    %v1544 = vld [vmem:[#allocation10 + $0x48] sm:$0xff]
    %v1545 = vld [vmem:[#allocation10 + $0x50] sm:$0xff]
    %v1546 = vld [vmem:[#allocation10 + $0x58] sm:$0xff]
    %v1547 = vld [vmem:[#allocation10 + $0x60] sm:$0xff]
    %v1548 = vld [vmem:[#allocation10 + $0x68] sm:$0xff]
    %v1549 = vld [vmem:[#allocation10 + $0x70] sm:$0xff]
    %v1550 = vld [vmem:[#allocation10 + $0x78] sm:$0xff]
    %v1551 = vld [vmem:[%s6] sm:$0x1]
    %v1553 = vlaneseq
    %v1554 = vshrl.u32 %v1553, 7
    %v1555 = vsub.s32 0, %v1554
    %v1556 = vrot.slane %v1551, %v1555
    %1558 = vmatprep.subr.mxu0 0.0
    %1559 = vmatpush1.msra.mxu0 %v1535
    %1560 = vmatprep.subr.mxu0 0.0
    %1561 = vmatpush1.msra.mxu0 %v1536
    %1562 = vmatprep.subr.mxu0 0.0
    %1563 = vmatpush1.msra.mxu0 %v1537
    %1564 = vmatprep.subr.mxu0 0.0
    %1565 = vmatpush1.msra.mxu0 %v1538
    %1566 = vmatprep.subr.mxu0 0.0
    %1567 = vmatpush1.msra.mxu0 %v1539
    %1568 = vmatprep.subr.mxu0 0.0
    %1569 = vmatpush1.msra.mxu0 %v1540
    %1570 = vmatprep.subr.mxu0 0.0
    %1571 = vmatpush1.msra.mxu0 %v1541
    %1572 = vmatprep.subr.mxu0 0.0
    %1573 = vmatpush1.msra.mxu0 %v1542
    %1574 = vmatprep.subr.mxu0 0.0
    %1575 = vmatpush1.msra.mxu0 %v1543
    %1576 = vmatprep.subr.mxu0 0.0
    %1577 = vmatpush1.msra.mxu0 %v1544
    %1578 = vmatprep.subr.mxu0 0.0
    %1579 = vmatpush1.msra.mxu0 %v1545
    %1580 = vmatprep.subr.mxu0 0.0
    %1581 = vmatpush1.msra.mxu0 %v1546
    %1582 = vmatprep.subr.mxu0 0.0
    %1583 = vmatpush1.msra.mxu0 %v1547
    %1584 = vmatprep.subr.mxu0 0.0
    %1585 = vmatpush1.msra.mxu0 %v1548
    %1586 = vmatprep.subr.mxu0 0.0
    %1587 = vmatpush1.msra.mxu0 %v1549
    %1588 = vmatprep.subr.mxu0 0.0
    %1589 = vmatpush1.msra.mxu0 %v1550
    %1590 = vmatprep.subr.mxu0 0.0
    %1591 = vmatpush1.msra.mxu0 0.0
    %1592 = vmatprep.subr.mxu0 0.0
    %1593 = vmatpush1.msra.mxu0 0.0
    %1594 = vmatprep.subr.mxu0 0.0
    %1595 = vmatpush1.msra.mxu0 0.0
    %1596 = vmatprep.subr.mxu0 0.0
    %1597 = vmatpush1.msra.mxu0 0.0
    %1598 = vmatprep.subr.mxu0 0.0
    %1599 = vmatpush1.msra.mxu0 0.0
    %1600 = vmatprep.subr.mxu0 0.0
    %1601 = vmatpush1.msra.mxu0 0.0
    %1602 = vmatprep.subr.mxu0 0.0
    %1603 = vmatpush1.msra.mxu0 0.0
    %1604 = vmatprep.subr.mxu0 0.0
    %1605 = vmatpush1.msra.mxu0 0.0
    %1606 = vmatprep.subr.mxu0 0.0
    %1607 = vmatpush1.msra.mxu0 0.0
    %1608 = vmatprep.subr.mxu0 0.0
    %1609 = vmatpush1.msra.mxu0 0.0
    %1610 = vmatprep.subr.mxu0 0.0
    %1611 = vmatpush1.msra.mxu0 0.0
    %1612 = vmatprep.subr.mxu0 0.0
    %1613 = vmatpush1.msra.mxu0 0.0
    %1614 = vmatprep.subr.mxu0 0.0
    %1615 = vmatpush1.msra.mxu0 0.0
    %1616 = vmatprep.subr.mxu0 0.0
    %1617 = vmatpush1.msra.mxu0 0.0
    %1618 = vmatprep.subr.mxu0 0.0
    %1619 = vmatpush1.msra.mxu0 0.0
    %1620 = vmatprep.subr.mxu0 0.0
    %1621 = vmatpush1.msra.mxu0 0.0
    %1622 = vmatprep.mubr.f32.mxu0 0.0
    %1623 = vmatmul.mubr.f32.gmra.mrb[0].mxu0 %v1534
    %v1624 = vpop.f32.mrb[0].mxu0
    %v1625 = vadd.f32 %v1556, %v1624
    %v1626 = vpop.f32.mrb[0].mxu0
    %1627 = vdwg.mxu0
    %1628 = vmax.xlane.f32.xlu0 %v1625
    %v1629 = vpop.xlane.xlu0 %1628
    %v1630 = vsub.f32 %v1625, %v1629
    %v1631 = vmul.f32 %v1630, 1.442695
    %v1632 = vpow.pop %v1631
    %1633 = vadd.xlane.f32.xlu0 %v1632
    %v1634 = vpop.xlane.xlu0 %1633
    %v1635 = vlog2.pop %v1634
    %v1636 = vmul.f32 %v1635, 0.6931472
    %v1637 = vadd.f32 %v1629, %v1636
    %v1638 = vsub.f32 %v1625, %v1637
    %s1639 = scalar_lea.vmem [#allocation11], 32
    %1640 = vst [vmem:[%s1639] sm:$0xff] %v1638
    %1641 = vst [vmem:[#allocation12] sm:$0xff] %v1533
    // Predicated region
    $region50: #{tpu_custom_call.1} parent=1 // pred_check
      _
    $region51: #{tpu_custom_call.1} parent=1 // pred_check_branch
      %1643 = sbr.rel (0) target = $region53
    $region52: #{tpu_custom_call.1} parent=1 // pred_region
      %s1645 = ssub.s32 640, 640
      %1646 = vsyncadd [#allocation4], %s1645
      %s1647 = sshll.u32 [#allocation11], 4
      %s1648 = int_to_ptr.vmem [resolvable:$true] %s1647
      %1653 = dma.vmem_to_hbm [thread:$0]  %s1648, 640, %s7, [#allocation4], 128, 128, 8
    $region53: #{tpu_custom_call.1} parent=1 // pred_fallthru
      _
    // Predicated region
    $region54: #{tpu_custom_call.1} parent=1 // pred_check
      _
    $region55: #{tpu_custom_call.1} parent=1 // pred_check_branch
      %1655 = sbr.rel (0) target = $region57
    $region56: #{tpu_custom_call.1} parent=1 // pred_region
      %s1657 = ssub.s32 128, 128
      %1658 = vsyncadd [#allocation13], %s1657
      %s1660 = sshll.u32 [#allocation12], 4
      %s1661 = int_to_ptr.vmem [resolvable:$true] %s1660
      %1663 = dma.vmem_to_hbm [thread:$0]  %s1661, 128, %s8, [#allocation13]
    $region57: #{tpu_custom_call.1} parent=1 // pred_fallthru
      _
    // Predicated region
    $region58: #{tpu_custom_call.1} parent=1 // pred_check
      _
    $region59: #{tpu_custom_call.1} parent=1 // pred_check_branch
      %1665 = sbr.rel (0) target = $region61
    $region60: #{tpu_custom_call.1} parent=1 // pred_region
      %1666 = dma.done [#allocation4], 640
    $region61: #{tpu_custom_call.1} parent=1 // pred_fallthru
      _
    // Predicated region
    $region62: #{tpu_custom_call.1} parent=1 // pred_check
      _
    $region63: #{tpu_custom_call.1} parent=1 // pred_check_branch
      %1668 = sbr.rel (0) target = $region65
    $region64: #{tpu_custom_call.1} parent=1 // pred_region
      %1669 = dma.done [#allocation13], 128
    $region65: #{tpu_custom_call.1} parent=1 // pred_fallthru
      _
    %1670 = vsyncpa [#allocation3], 1
    %1671 = vsyncpa [#allocation6], 1
    %1672 = vsyncpa [#allocation9], 1
    %1673 = vsyncpa [#allocation4], 1
    %1674 = vsyncpa [#allocation13], 1

</llo_original>
